<compile_context>
chip_gen: v5e
topology: v5e:2x2
jax: 0.10.0
libtpu: 0.0.40
codegen_flags: <defaults>
</compile_context>

<pallas_src>
import functools
import math

import jax
import jax.numpy as jnp
from jax.experimental import pallas as pl
from jax.experimental.pallas import tpu as pltpu


def _round_up(n, m):
    return ((n + m - 1) // m) * m


def _choose_block_m(M, requested):
    """Pick a multiple-of-16 row tile.

    Prefers a tile that exactly divides the (16-aligned) row count, so the wrapper
    never materializes a padded copy of x; falls back to padding only when no useful
    divisor exists.  Also prefers >=2 grid steps so the "parallel" grid axis can shard
    across v7x's two TensorCores.
    Returns (block_m, padded_row_count).
    """
    M16 = _round_up(max(M, 1), 16)
    req = max(16, _round_up(min(requested, M16), 16))
    best = 16
    d = 16
    while d <= req:
        if M16 % d == 0:
            best = d
        d += 16
    if best < min(req, 128) and M16 > 256:
        # No reasonable divisor: accept one padded copy of x rather than tiny grid steps.
        return req, _round_up(M16, req)
    # >=2 grid steps when the row count allows it (v7x megacore sharding).
    if M16 // best < 2 and M16 >= 32 and (M16 // 2) % 16 == 0 and (M16 // 2) <= req:
        best = M16 // 2
    return best, M16


def _spikenet_kernel(x_ref, w_ref, b_ref, out_ref, *, scale, in_thr, strict_in, vth):
    # ---- If2 input neuron: round(x*scale) >= scale, collapsed to one compare ----
    v = x_ref[...].astype(jnp.float32) * scale
    s_in = (v > in_thr) if strict_in else (v >= in_thr)     # trace-time branch
    s_in = s_in.astype(jnp.bfloat16)                        # exact 0/1 -> bf16 MXU operand

    # ---- inner net: Linear(D, Hout) on the bf16 MXU, f32 accumulation ----
    y = jnp.dot(s_in, w_ref[...], preferred_element_type=jnp.float32)
    y = y + b_ref[...]                                      # explicit bias (matches module order)

    # ---- If3 output neuron (membrane starts at 0): y >= vth ----
    out_ref[...] = (y >= vth).astype(out_ref.dtype)         # bf16 spikes (0/1 exact)


def spikenet_forward(x, w, b, *, scale=100.0, vth=1.0, block_m=512, x_dtype=jnp.float32):
    """SpikeNet forward.

    x: (..., C, H, W) float — all leading dims (timesteps, batch, ...) fold into
       independent rows, each a fresh single-step forward pass.
    w: (C*H*W, Hout) float32;  b: (Hout,) float32.
    x_dtype: set to jnp.bfloat16 to halve the dominant x HBM stream (~2x at the
       roofline) — changes numerics for x within bf16 resolution of the spike
       threshold, so it is off by default.
    Returns (..., Hout) float32 spikes (0.0 / 1.0).
    """
    *lead, C, H, W = x.shape
    D = C * H * W
    Hout = w.shape[1]
    M = math.prod(lead) if lead else 1

    # Lane-dense layout: pad output columns (and D, if misaligned) to multiples of 128.
    D_p = _round_up(max(D, 128), 128)
    n_pad = _round_up(max(Hout, 128), 128)

    # Input threshold equivalent to round(x*scale) >= scale (round half-to-even):
    # for integer target t, round(v) >= t  <=>  v >= t-0.5 (t even) / v > t-0.5 (t odd).
    t = int(round(scale)) if float(scale).is_integer() else math.ceil(scale)
    in_thr = float(t) - 0.5
    strict_in = bool(t % 2)

    block_m, m_pad = _choose_block_m(M, block_m)
    grid_m = m_pad // block_m

    x2 = x.reshape(M, D).astype(x_dtype)        # metadata-only for contiguous f32 input
    if m_pad != M or D_p != D:
        # TODO(synk): this materializes one extra HBM copy of x; it is only hit when the
        # row count has no friendly multiple-of-16 divisor or D is not a multiple of 128.
        x2 = jnp.pad(x2, ((0, m_pad - M), (0, D_p - D)))

    # bf16 weights (exact-0/1 LHS -> native bf16 MXU path); zero pad rows/cols are inert.
    w_p = jnp.zeros((D_p, n_pad), jnp.bfloat16).at[:D, :Hout].set(w.astype(jnp.bfloat16))
    b_row = jnp.zeros((1, n_pad), jnp.float32).at[0, :Hout].set(b.astype(jnp.float32))

    kernel = functools.partial(_spikenet_kernel, scale=float(scale), in_thr=in_thr,
                               strict_in=strict_in, vth=float(vth))

    x_bytes = jnp.dtype(x_dtype).itemsize
    out_bytes = 2  # bf16 spike output
    # Conservative budget (assumes double-buffered weights in case Buffered(1) is
    # unavailable); see module comment for the v7x K-tiling switch point.
    vmem_need = (2 * block_m * D_p * x_bytes          # x tile double buffer
                 + 2 * D_p * n_pad * 2                # bf16 weights
                 + 2 * n_pad * 4                      # bias row
                 + 2 * block_m * n_pad * out_bytes)   # bf16 out double buffer
    vmem_limit_bytes = int(min(max(vmem_need + (2 << 20), 16 << 20), 64 << 20))

    cost = pl.CostEstimate(
        flops=2 * m_pad * D_p * n_pad,
        transcendentals=0,
        bytes_accessed=(m_pad * D_p * x_bytes + D_p * n_pad * 2
                        + n_pad * 4 + m_pad * n_pad * out_bytes),
    )

    def _build(single_buffer_consts):
        const_kw = dict(pipeline_mode=pl.Buffered(1)) if single_buffer_consts else {}
        return pl.pallas_call(
            kernel,
            out_shape=jax.ShapeDtypeStruct((m_pad, n_pad), jnp.bfloat16),
            grid=(grid_m,),
            in_specs=[
                pl.BlockSpec((block_m, D_p), lambda i: (i, 0)),        # streamed x row tiles
                pl.BlockSpec((D_p, n_pad), lambda i: (0, 0), **const_kw),  # resident bf16 weights
                pl.BlockSpec((1, n_pad), lambda i: (0, 0), **const_kw),    # resident bias row
            ],
            out_specs=pl.BlockSpec((block_m, n_pad), lambda i: (i, 0)),
            compiler_params=pltpu.CompilerParams(
                dimension_semantics=("parallel",),      # shard row tiles across TCs (v7x)
                vmem_limit_bytes=vmem_limit_bytes,
            ),
            cost_estimate=cost,
        )

    try:
        out = _build(True)(x2, w_p, b_row)
    except Exception:
        # pipeline_mode=pl.Buffered(1) (single-buffer the constant operands) is not
        # available on every jax version; fall back to default double-buffering.
        out = _build(False)(x2, w_p, b_row)

    # Slice off padding, restore the module's float32 output dtype.
    return out[:M, :Hout].astype(jnp.float32).reshape(*lead, Hout)


def spikenet_reference(x, w, b, *, scale=100.0, vth=1.0, w_dtype=jnp.bfloat16):
    """Literal pure-JAX single-step SpikeNet forward (fresh membranes).

    w_dtype=jnp.bfloat16 mirrors the kernel's MXU weight cast (the only numerics
    change vs the f32 PyTorch module); pass jnp.float32 for exact f32 module math —
    spikes may then differ from the kernel only where the pre-activation lies within
    bf16 rounding of the threshold.
    """
    *lead, C, H, W = x.shape
    M = math.prod(lead) if lead else 1
    x2 = x.reshape(M, C * H * W).astype(jnp.float32)
    q = jnp.round(x2 * scale)                            # torch.round(x * scale)
    s_in = (q >= scale).astype(jnp.float32)              # If2: 0 + q >= V_th(=scale)
    y = jnp.dot(s_in.astype(w_dtype), w.astype(w_dtype),
                preferred_element_type=jnp.float32) + b.astype(jnp.float32)
    out = (y >= vth).astype(jnp.float32)                 # If3: 0 + y >= V_th(=vth)
    return out.reshape(*lead, w.shape[1])


if __name__ == "__main__":
    key = jax.random.PRNGKey(0)
    k_x, k_w, k_b = jax.random.split(key, 3)

    # 8 SNN timesteps x batch 4 fold into 32 independent rows -> 2 x (16-row) grid steps.
    T, B, C, H, W = 8, 4, 4, 16, 16
    HIDDEN = 32
    D = C * H * W
    SCALE = 100.0
    VTH = 1.0

    x = jax.random.uniform(k_x, (T, B, C, H, W), jnp.float32, minval=0.0, maxval=2.0)
    w = jax.random.normal(k_w, (D, HIDDEN), jnp.float32) * 0.05
    b = jax.random.normal(k_b, (HIDDEN,), jnp.float32) * 0.1

    out = jax.block_until_ready(spikenet_forward(x, w, b, scale=SCALE, vth=VTH))
    ref = spikenet_reference(x, w, b, scale=SCALE, vth=VTH)

    assert out.shape == (T, B, HIDDEN)
    assert out.dtype == jnp.float32
    assert jnp.array_equal(out, ref), "Pallas output != JAX reference"
    print("KERNEL_OK")
</pallas_src>

<mosaic_0001>
module attributes {stable_mosaic.version = 11 : i64} {
  func.func @_spikenet_kernel(%arg0: i32, %arg1: memref<16x1024xf32, #tpu.memory_space<vmem>>, %arg2: memref<1024x128xbf16, #tpu.memory_space<vmem>>, %arg3: memref<1x128xf32, #tpu.memory_space<vmem>>, %arg4: memref<16x128xbf16, #tpu.memory_space<vmem>>) attributes {dimension_semantics = [#tpu.dimension_semantics<parallel>], iteration_bounds = array<i64: 2>, scalar_prefetch = 0 : i64, scratch_operands = 0 : i64, tpu.core_type = #tpu.core_type<tc>, window_params = [{transform_indices = @transform_0, window_bounds = array<i64: 16, 1024>}, {pipeline_mode = #tpu.pipeline_mode<synchronous>, transform_indices = @transform_1, window_bounds = array<i64: 1024, 128>}, {pipeline_mode = #tpu.pipeline_mode<synchronous>, transform_indices = @transform_2, window_bounds = array<i64: 1, 128>}, {transform_indices = @transform_3, window_bounds = array<i64: 16, 128>}]} {
    %c0 = arith.constant 0 : index
    %c0_0 = arith.constant 0 : index
    %0 = vector.load %arg1[%c0, %c0_0] : memref<16x1024xf32, #tpu.memory_space<vmem>>, vector<16x1024xf32>
    %cst = arith.constant 1.000000e+02 : f32
    %1 = vector.broadcast %cst : f32 to vector<16x1024xf32>
    %2 = arith.mulf %0, %1 : vector<16x1024xf32>
    %cst_1 = arith.constant 9.950000e+01 : f32
    %3 = vector.broadcast %cst_1 : f32 to vector<16x1024xf32>
    %4 = arith.cmpf oge, %2, %3 : vector<16x1024xf32>
    %5 = arith.extui %4 : vector<16x1024xi1> to vector<16x1024xi32>
    %6 = arith.sitofp %5 : vector<16x1024xi32> to vector<16x1024xf32>
    %7 = arith.truncf %6 : vector<16x1024xf32> to vector<16x1024xbf16>
    %c0_2 = arith.constant 0 : index
    %c0_3 = arith.constant 0 : index
    %8 = vector.load %arg2[%c0_2, %c0_3] : memref<1024x128xbf16, #tpu.memory_space<vmem>>, vector<1024x128xbf16>
    %cst_4 = arith.constant dense<0.000000e+00> : vector<16x128xf32>
    %9 = tpu.matmul %7, %8, %cst_4 {dimension_numbers = #tpu.dot_dimension_numbers<[1], [0], [0], [1], [0, 0, 1, 1], [], []>} : vector<16x1024xbf16>, vector<1024x128xbf16>, vector<16x128xf32> -> vector<16x128xf32>
    %c0_5 = arith.constant 0 : index
    %c0_6 = arith.constant 0 : index
    %10 = vector.load %arg3[%c0_5, %c0_6] : memref<1x128xf32, #tpu.memory_space<vmem>>, vector<1x128xf32>
    %11 = vector.broadcast %10 : vector<1x128xf32> to vector<16x128xf32>
    %12 = arith.addf %9, %11 : vector<16x128xf32>
    %cst_7 = arith.constant 1.000000e+00 : f32
    %13 = vector.broadcast %cst_7 : f32 to vector<16x128xf32>
    %14 = arith.cmpf oge, %12, %13 : vector<16x128xf32>
    %15 = arith.extui %14 : vector<16x128xi1> to vector<16x128xi32>
    %16 = arith.sitofp %15 : vector<16x128xi32> to vector<16x128xf32>
    %17 = arith.truncf %16 : vector<16x128xf32> to vector<16x128xbf16>
    %c0_8 = arith.constant 0 : index
    %c0_9 = arith.constant 0 : index
    %18 = vector.load %arg4[%c0_8, %c0_9] : memref<16x128xbf16, #tpu.memory_space<vmem>>, vector<16x128xbf16>
    tpu.vector_store %arg4[%c0_8, %c0_9], %17 {strides = array<i32>} : memref<16x128xbf16, #tpu.memory_space<vmem>>, vector<16x128xbf16>,
    return
  }
  func.func @transform_0(%arg0: i32) -> (i32, i32) {
    %c0_i32 = arith.constant 0 : i32
    %c0_i32_0 = arith.constant 0 : i32
    return %arg0, %c0_i32 : i32, i32
  }
  func.func @transform_1(%arg0: i32) -> (i32, i32) {
    %c0_i32 = arith.constant 0 : i32
    %c0_i32_0 = arith.constant 0 : i32
    %c0_i32_1 = arith.constant 0 : i32
    return %c0_i32, %c0_i32_0 : i32, i32
  }
  func.func @transform_2(%arg0: i32) -> (i32, i32) {
    %c0_i32 = arith.constant 0 : i32
    %c0_i32_0 = arith.constant 0 : i32
    %c0_i32_1 = arith.constant 0 : i32
    return %c0_i32, %c0_i32_0 : i32, i32
  }
  func.func @transform_3(%arg0: i32) -> (i32, i32) {
    %c0_i32 = arith.constant 0 : i32
    %c0_i32_0 = arith.constant 0 : i32
    return %arg0, %c0_i32 : i32, i32
  }
}

module attributes {stable_mosaic.version = 11 : i64} {
  func.func @_spikenet_kernel(%arg0: i32, %arg1: memref<16x1024xf32, #tpu.memory_space<vmem>>, %arg2: memref<1024x128xbf16, #tpu.memory_space<vmem>>, %arg3: memref<1x128xf32, #tpu.memory_space<vmem>>, %arg4: memref<16x128xbf16, #tpu.memory_space<vmem>>) attributes {dimension_semantics = [#tpu.dimension_semantics<parallel>], iteration_bounds = array<i64: 2>, scalar_prefetch = 0 : i64, scratch_operands = 0 : i64, tpu.core_type = #tpu.core_type<tc>, window_params = [{transform_indices = @transform_0, window_bounds = array<i64: 16, 1024>}, {pipeline_mode = #tpu.pipeline_mode<synchronous>, transform_indices = @transform_1, window_bounds = array<i64: 1024, 128>}, {pipeline_mode = #tpu.pipeline_mode<synchronous>, transform_indices = @transform_2, window_bounds = array<i64: 1, 128>}, {transform_indices = @transform_3, window_bounds = array<i64: 16, 128>}]} {
    %c0 = arith.constant 0 : index
    %c0_0 = arith.constant 0 : index
    %0 = vector.load %arg1[%c0, %c0_0] : memref<16x1024xf32, #tpu.memory_space<vmem>>, vector<16x1024xf32>
    %cst = arith.constant 1.000000e+02 : f32
    %1 = vector.broadcast %cst : f32 to vector<16x1024xf32>
    %2 = arith.mulf %0, %1 : vector<16x1024xf32>
    %cst_1 = arith.constant 9.950000e+01 : f32
    %3 = vector.broadcast %cst_1 : f32 to vector<16x1024xf32>
    %4 = arith.cmpf oge, %2, %3 : vector<16x1024xf32>
    %5 = arith.extui %4 : vector<16x1024xi1> to vector<16x1024xi32>
    %6 = arith.sitofp %5 : vector<16x1024xi32> to vector<16x1024xf32>
    %7 = arith.truncf %6 : vector<16x1024xf32> to vector<16x1024xbf16>
    %c0_2 = arith.constant 0 : index
    %c0_3 = arith.constant 0 : index
    %8 = vector.load %arg2[%c0_2, %c0_3] : memref<1024x128xbf16, #tpu.memory_space<vmem>>, vector<1024x128xbf16>
    %cst_4 = arith.constant dense<0.000000e+00> : vector<16x128xf32>
    %9 = tpu.matmul %7, %8, %cst_4 {dimension_numbers = #tpu.dot_dimension_numbers<[1], [0], [0], [1], [0, 0, 1, 1], [], []>} : vector<16x1024xbf16>, vector<1024x128xbf16>, vector<16x128xf32> -> vector<16x128xf32>
    %c0_5 = arith.constant 0 : index
    %c0_6 = arith.constant 0 : index
    %10 = vector.load %arg3[%c0_5, %c0_6] : memref<1x128xf32, #tpu.memory_space<vmem>>, vector<1x128xf32>
    %11 = vector.broadcast %10 : vector<1x128xf32> to vector<16x128xf32>
    %12 = arith.addf %9, %11 : vector<16x128xf32>
    %cst_7 = arith.constant 1.000000e+00 : f32
    %13 = vector.broadcast %cst_7 : f32 to vector<16x128xf32>
    %14 = arith.cmpf oge, %12, %13 : vector<16x128xf32>
    %15 = arith.extui %14 : vector<16x128xi1> to vector<16x128xi32>
    %16 = arith.sitofp %15 : vector<16x128xi32> to vector<16x128xf32>
    %17 = arith.truncf %16 : vector<16x128xf32> to vector<16x128xbf16>
    %c0_8 = arith.constant 0 : index
    %c0_9 = arith.constant 0 : index
    %18 = vector.load %arg4[%c0_8, %c0_9] : memref<16x128xbf16, #tpu.memory_space<vmem>>, vector<16x128xbf16>
    tpu.vector_store %arg4[%c0_8, %c0_9], %17 {strides = array<i32>} : memref<16x128xbf16, #tpu.memory_space<vmem>>, vector<16x128xbf16>,
    return
  }
  func.func @transform_0(%arg0: i32) -> (i32, i32) {
    %c0_i32 = arith.constant 0 : i32
    %c0_i32_0 = arith.constant 0 : i32
    return %arg0, %c0_i32 : i32, i32
  }
  func.func @transform_1(%arg0: i32) -> (i32, i32) {
    %c0_i32 = arith.constant 0 : i32
    %c0_i32_0 = arith.constant 0 : i32
    %c0_i32_1 = arith.constant 0 : i32
    return %c0_i32, %c0_i32_0 : i32, i32
  }
  func.func @transform_2(%arg0: i32) -> (i32, i32) {
    %c0_i32 = arith.constant 0 : i32
    %c0_i32_0 = arith.constant 0 : i32
    %c0_i32_1 = arith.constant 0 : i32
    return %c0_i32, %c0_i32_0 : i32, i32
  }
  func.func @transform_3(%arg0: i32) -> (i32, i32) {
    %c0_i32 = arith.constant 0 : i32
    %c0_i32_0 = arith.constant 0 : i32
    return %arg0, %c0_i32 : i32, i32
  }
}

</mosaic_0001>

<llo_original>
// kernel: tpu_custom_call.1
$region0: #{tpu_custom_call.1}
  #allocation0 [shape = 'u32[]', space=smem, size = 0x4, offset = 0x4, fixed_abs, tag = 'smem constant byte address 0x4 - core index']
  #allocation1 [shape = 'u32[72,128]{1,0:T(1,128)}', space=vmem, size = 0x9000, scoped, tag = 'internal scratch']
  %s0 = inlined_call_operand.hbm [shape: f32[32,1024], index: 0, kind: input, shape index: {}]
  %s1 = inlined_call_operand.hbm [shape: bf16[1024,128], index: 1, kind: input, shape index: {}]
  %s2 = inlined_call_operand.vmem [shape: f32[1,128], index: 2, kind: input, shape index: {}]
  %s3 = inlined_call_operand.hbm [shape: bf16[32,128], index: 3, kind: output, shape index: {}]
  %s4 = sld [smem:[#allocation0]]
  $region53: #{tpu_custom_call.1} parent=0
    _
  %s6 = ssub.s32 1, %s4
  %s7 = scalar_select 0, %s6, %s4
  $region1: #{tpu_custom_call.1} parent=0
    #allocation2 [shape = 'u8[131072]{0}', space=vmem, size = 0x20000, scoped, tag = 'input window, operand 0']
    #allocation3 [shape = 's32[2]{0}', space=sflag, size = 0x8, scoped, tag = 'scoped memory for tpu_custom_call.1']
    #allocation4 [shape = 's32[2]{0}', space=sflag, size = 0x8, scoped, tag = 'scoped memory for tpu_custom_call.1']
    #allocation5 [shape = 'u8[262144]{0}', space=vmem, size = 0x40000, scoped, tag = 'input window, operand 1, single buffered']
    #allocation6 [shape = 's32[1]{0}', space=sflag, size = 0x4, scoped, tag = 'scoped memory for tpu_custom_call.1']
    #allocation7 [shape = 'u8[8192]{0}', space=vmem, size = 0x2000, scoped, tag = 'output window, operand 0']
    %8 = vsyncpa [#allocation3], 0
    %s9 = scalar_lea.sflag [#allocation3], 1
    %10 = vsyncpa %s9, 0
    %11 = vsyncpa [#allocation6], 0
    %12 = vsyncpa [#allocation4], 0
    %s13 = scalar_lea.sflag [#allocation4], 1
    %14 = vsyncpa %s13, 0
    loop: start=0, step=1, limit=4
    $region2: #{tpu_custom_call.1} parent=1 // loop_pre_header
      _
    $region3: #{tpu_custom_call.1} parent=1 // loop_header
      %s16 = sphi 0, %s20
      %p17 = scmp.ge.s32.totalorder %s16, 4
      %s26 = sphi 0, %s28
      %s29 = sphi 0, %s26
      %s30 = sphi 0, %s29
      %s46 = sphi 0, %s30
      %s50 = sphi 0, %s50
      %s52 = sphi 0, %s50
      %s53 = sphi 0, %s52
      %s67 = sphi 0, %s53
      %s71 = sphi 0, %s71
      %s73 = sphi 0, %s71
      %s74 = sphi 0, %s73
      %s88 = sphi 0, %s74
      %s94 = sphi 0, %s96
      %s97 = sphi 0, %s94
      %s98 = sphi 0, %s97
      %s114 = sphi 0, %s98
    $region4: #{tpu_custom_call.1} parent=1 // loop_header_branch
      %19 = sbr.rel (%p17) target = $region8
    $region5: #{tpu_custom_call.1} parent=1 // loop_body
      %s21 = ssub.s32 %s16, 1
      %s22 = ssub.s32 %s16, 2
      %s23 = sadd.s32 %s16, 1
      %s24 = ssub.s32 %s16, %s23
      %p25 = scmp.eq.s32.totalorder %s24, 0
      %s27 = sadd.s32 %s26, 1
      %s28 = scalar_select %p25, %s26, %s27
      %p31 = pneg %p25
      %p32 = scmp.eq.s32.totalorder %s16, 1
      %p33 = por %p31, %p32
      %p34 = scmp.ne.s32.totalorder %s26, %s29
      %p35 = scmp.eq.s32.totalorder %s16, 0
      %p36 = por %p34, %p35
      %p37 = scmp.ne.s32.totalorder %s26, %s29
      %p38 = scmp.eq.s32.totalorder %s21, 1
      %p39 = por %p37, %p38
      %p40 = scmp.ne.s32.totalorder %s29, %s30
      %p41 = scmp.eq.s32.totalorder %s21, 0
      %p42 = por %p40, %p41
      %p43 = scmp.ne.s32.totalorder %s29, %s30
      %p44 = scmp.eq.s32.totalorder %s22, 1
      %p45 = por %p43, %p44
      %p47 = scmp.ne.s32.totalorder %s30, %s46
      %p48 = scmp.eq.s32.totalorder %s22, 0
      %p49 = por %p47, %p48
      %s51 = sadd.s32 %s50, 1
      %p54 = scmp.eq.s32.totalorder %s16, 1
      %p55 = scmp.ne.s32.totalorder %s50, %s52
      %p56 = scmp.eq.s32.totalorder %s16, 0
      %p57 = por %p55, %p56
      %p58 = scmp.ne.s32.totalorder %s50, %s52
      %p59 = scmp.eq.s32.totalorder %s21, 1
      %p60 = por %p58, %p59
      %p61 = scmp.ne.s32.totalorder %s52, %s53
      %p62 = scmp.eq.s32.totalorder %s21, 0
      %p63 = por %p61, %p62
      %p64 = scmp.ne.s32.totalorder %s52, %s53
      %p65 = scmp.eq.s32.totalorder %s22, 1
      %p66 = por %p64, %p65
      %p68 = scmp.ne.s32.totalorder %s53, %s67
      %p69 = scmp.eq.s32.totalorder %s22, 0
      %p70 = por %p68, %p69
      %s72 = sadd.s32 %s71, 1
      %p75 = scmp.eq.s32.totalorder %s16, 1
      %p76 = scmp.ne.s32.totalorder %s71, %s73
      %p77 = scmp.eq.s32.totalorder %s16, 0
      %p78 = por %p76, %p77
      %p79 = scmp.ne.s32.totalorder %s71, %s73
      %p80 = scmp.eq.s32.totalorder %s21, 1
      %p81 = por %p79, %p80
      %p82 = scmp.ne.s32.totalorder %s73, %s74
      %p83 = scmp.eq.s32.totalorder %s21, 0
      %p84 = por %p82, %p83
      %p85 = scmp.ne.s32.totalorder %s73, %s74
      %p86 = scmp.eq.s32.totalorder %s22, 1
      %p87 = por %p85, %p86
      %p89 = scmp.ne.s32.totalorder %s74, %s88
      %p90 = scmp.eq.s32.totalorder %s22, 0
      %p91 = por %p89, %p90
      %s92 = ssub.s32 %s16, %s23
      %p93 = scmp.eq.s32.totalorder %s92, 0
      %s95 = sadd.s32 %s94, 1
      %s96 = scalar_select %p93, %s94, %s95
      %p99 = pneg %p93
      %p100 = scmp.eq.s32.totalorder %s16, 1
      %p101 = por %p99, %p100
      %p102 = scmp.ne.s32.totalorder %s94, %s97
      %p103 = scmp.eq.s32.totalorder %s16, 0
      %p104 = por %p102, %p103
      %p105 = scmp.ne.s32.totalorder %s94, %s97
      %p106 = scmp.eq.s32.totalorder %s21, 1
      %p107 = por %p105, %p106
      %p108 = scmp.ne.s32.totalorder %s97, %s98
      %p109 = scmp.eq.s32.totalorder %s21, 0
      %p110 = por %p108, %p109
      %p111 = scmp.ne.s32.totalorder %s97, %s98
      %p112 = scmp.eq.s32.totalorder %s22, 1
      %p113 = por %p111, %p112
      %p115 = scmp.ne.s32.totalorder %s98, %s114
      %p116 = scmp.eq.s32.totalorder %s22, 0
      %p117 = por %p115, %p116
      %p118 = scmp.le.s32.totalorder 1, %s16
      %p119 = scmp.lt.s32.totalorder %s16, 3
      %p120 = pnand %p118, %p119
      %p121 = pneg %p120
      // Predicated region
      $region9: #{tpu_custom_call.1} parent=5 // pred_check
        _
      $region10: #{tpu_custom_call.1} parent=5 // pred_check_branch
        %123 = sbr.rel (%p120) target = $region12
      $region11: #{tpu_custom_call.1} parent=5 // pred_region
        %s124 = ssub.s32 %s16, 1
        // Predicated region
        $region13: #{tpu_custom_call.1} parent=11 // pred_check
          %p125 = pneg %p63
        $region14: #{tpu_custom_call.1} parent=11 // pred_check_branch
          %127 = sbr.rel (%p125) target = $region16
        $region15: #{tpu_custom_call.1} parent=11 // pred_region
          %129 = vsyncadd [#allocation6], 0
          %s130 = sshll.u32 %s1, 4
          %s131 = int_to_ptr.hbm [resolvable:$true] %s130
          %s132 = sshll.u32 [#allocation5], 4
          %s133 = int_to_ptr.vmem [resolvable:$true] %s132
          %138 = dma.hbm_to_vmem [thread:$0]  %s131, 8192, %s133, [#allocation6], 64, 64, 4
        $region16: #{tpu_custom_call.1} parent=11 // pred_fallthru
          _
        // Predicated region
        $region17: #{tpu_custom_call.1} parent=11 // pred_check
          %p139 = pneg %p84
        $region18: #{tpu_custom_call.1} parent=11 // pred_check_branch
          %141 = sbr.rel (%p139) target = $region20
        $region19: #{tpu_custom_call.1} parent=11 // pred_region
          _
        $region20: #{tpu_custom_call.1} parent=11 // pred_fallthru
          _
      $region12: #{tpu_custom_call.1} parent=5 // pred_fallthru
        _
      %p142 = scmp.lt.s32.totalorder %s16, 2
      // Predicated region
      $region21: #{tpu_custom_call.1} parent=5 // pred_check
        %p143 = pneg %p142
      $region22: #{tpu_custom_call.1} parent=5 // pred_check_branch
        %145 = sbr.rel (%p143) target = $region24
      $region23: #{tpu_custom_call.1} parent=5 // pred_region
        // Predicated region
        $region25: #{tpu_custom_call.1} parent=23 // pred_check
          %p146 = pneg %p36
        $region26: #{tpu_custom_call.1} parent=23 // pred_check_branch
          %148 = sbr.rel (%p146) target = $region28
        $region27: #{tpu_custom_call.1} parent=23 // pred_region
          %s149 = sand.u32 %s26, 1
          %s150 = scalar_lea.sflag [#allocation3], %s149
          %s151 = sand.u32 %s26, 1
          %s152 = smul.addr %s151, 128
          %s153 = scalar_lea.vmem [#allocation2], %s152
          %s154 = smul.u32 2, %s16
          %156 = vsyncadd %s150, 0
          %s157 = smul.addr %s154, 8
          %s158 = smul.addr %s157, 8
          %s159 = scalar_lea.hbm %s0, %s158
          %s160 = sshll.u32 %s159, 4
          %s161 = int_to_ptr.hbm [resolvable:$true] %s160
          %s162 = sshll.u32 %s153, 4
          %s163 = int_to_ptr.vmem [resolvable:$true] %s162
          %168 = dma.hbm_to_vmem [thread:$0]  %s161, 2048, %s163, %s150, 1024, 1024, 64
        $region28: #{tpu_custom_call.1} parent=23 // pred_fallthru
          _
      $region24: #{tpu_custom_call.1} parent=5 // pred_fallthru
        _
      %p169 = scmp.le.s32.totalorder 1, %s16
      %p170 = scmp.lt.s32.totalorder %s16, 3
      %p171 = pnand %p169, %p170
      %p172 = pneg %p171
      // Predicated region
      $region29: #{tpu_custom_call.1} parent=5 // pred_check
        _
      $region30: #{tpu_custom_call.1} parent=5 // pred_check_branch
        %174 = sbr.rel (%p171) target = $region32
      $region31: #{tpu_custom_call.1} parent=5 // pred_region
        %s175 = ssub.s32 %s16, 1
        %s176 = sand.u32 %s29, 1
        %s177 = scalar_lea.sflag [#allocation3], %s176
        %s178 = sand.u32 %s29, 1
        %s179 = smul.addr %s178, 128
        %s180 = scalar_lea.vmem [#allocation2], %s179
        // Predicated region
        $region33: #{tpu_custom_call.1} parent=31 // pred_check
          %p181 = pneg %p42
        $region34: #{tpu_custom_call.1} parent=31 // pred_check_branch
          %183 = sbr.rel (%p181) target = $region36
        $region35: #{tpu_custom_call.1} parent=31 // pred_region
          %185 = dma.done %s177, 2048
        $region36: #{tpu_custom_call.1} parent=31 // pred_fallthru
          _
        // Predicated region
        $region37: #{tpu_custom_call.1} parent=31 // pred_check
          %p186 = pneg %p63
        $region38: #{tpu_custom_call.1} parent=31 // pred_check_branch
          %188 = sbr.rel (%p186) target = $region40
        $region39: #{tpu_custom_call.1} parent=31 // pred_region
          %190 = dma.done [#allocation6], 8192
        $region40: #{tpu_custom_call.1} parent=31 // pred_fallthru
          _
        %s191 = sand.u32 %s29, 1
        %s192 = scalar_lea.sflag [#allocation3], %s191
        %s193 = sand.u32 %s29, 1
        %s194 = smul.addr %s193, 128
        %s195 = scalar_lea.vmem [#allocation2], %s194
        %p196 = pneg %p42
        %p197 = pneg %p39
        %p198 = pneg %p63
        %p199 = pneg %p60
        %p200 = pneg %p84
        %p201 = pneg %p81
        %p202 = pneg %p110
        %p203 = pneg %p107
        %s204 = sand.u32 %s97, 1
        %s205 = scalar_lea.sflag [#allocation4], %s204
        %s206 = sand.u32 %s97, 1
        %s207 = smul.addr %s206, 8
        %s208 = scalar_lea.vmem [#allocation7], %s207
        %s209 = smul.u32 2, %s21
        %s210 = smul.u32 2, %s21
        %v211 = vld [vmem:[%s180] sm:$0xff]
        %v212 = vld [vmem:[%s180 + $0x8] sm:$0xff]
        %v213 = vld [vmem:[%s180 + $0x10] sm:$0xff]
        %v214 = vld [vmem:[%s180 + $0x18] sm:$0xff]
        %v215 = vld [vmem:[%s180 + $0x20] sm:$0xff]
        %v216 = vld [vmem:[%s180 + $0x28] sm:$0xff]
        %v217 = vld [vmem:[%s180 + $0x30] sm:$0xff]
        %v218 = vld [vmem:[%s180 + $0x38] sm:$0xff]
        %v219 = vld [vmem:[%s180 + $0x40] sm:$0xff]
        %v220 = vld [vmem:[%s180 + $0x48] sm:$0xff]
        %v221 = vld [vmem:[%s180 + $0x50] sm:$0xff]
        %v222 = vld [vmem:[%s180 + $0x58] sm:$0xff]
        %v223 = vld [vmem:[%s180 + $0x60] sm:$0xff]
        %v224 = vld [vmem:[%s180 + $0x68] sm:$0xff]
        %v225 = vld [vmem:[%s180 + $0x70] sm:$0xff]
        %v226 = vld [vmem:[%s180 + $0x78] sm:$0xff]
        %v227 = vmul.f32 %v211, 100.0
        %v228 = vmul.f32 %v212, 100.0
        %v229 = vmul.f32 %v213, 100.0
        %v230 = vmul.f32 %v214, 100.0
        %v231 = vmul.f32 %v215, 100.0
        %v232 = vmul.f32 %v216, 100.0
        %v233 = vmul.f32 %v217, 100.0
        %v234 = vmul.f32 %v218, 100.0
        %v235 = vmul.f32 %v219, 100.0
        %v236 = vmul.f32 %v220, 100.0
        %v237 = vmul.f32 %v221, 100.0
        %v238 = vmul.f32 %v222, 100.0
        %v239 = vmul.f32 %v223, 100.0
        %v240 = vmul.f32 %v224, 100.0
        %v241 = vmul.f32 %v225, 100.0
        %v242 = vmul.f32 %v226, 100.0
        %vm243 = vcmp.ge.f32.partialorder %v227, 99.5
        %vm244 = vcmp.ge.f32.partialorder %v228, 99.5
        %vm245 = vcmp.ge.f32.partialorder %v229, 99.5
        %vm246 = vcmp.ge.f32.partialorder %v230, 99.5
        %vm247 = vcmp.ge.f32.partialorder %v231, 99.5
        %vm248 = vcmp.ge.f32.partialorder %v232, 99.5
        %vm249 = vcmp.ge.f32.partialorder %v233, 99.5
        %vm250 = vcmp.ge.f32.partialorder %v234, 99.5
        %vm251 = vcmp.ge.f32.partialorder %v235, 99.5
        %vm252 = vcmp.ge.f32.partialorder %v236, 99.5
        %vm253 = vcmp.ge.f32.partialorder %v237, 99.5
        %vm254 = vcmp.ge.f32.partialorder %v238, 99.5
        %vm255 = vcmp.ge.f32.partialorder %v239, 99.5
        %vm256 = vcmp.ge.f32.partialorder %v240, 99.5
        %vm257 = vcmp.ge.f32.partialorder %v241, 99.5
        %vm258 = vcmp.ge.f32.partialorder %v242, 99.5
        %v259 = vsel %vm243, 1, 0
        %v260 = vsel %vm244, 1, 0
        %v261 = vsel %vm245, 1, 0
        %v262 = vsel %vm246, 1, 0
        %v263 = vsel %vm247, 1, 0
        %v264 = vsel %vm248, 1, 0
        %v265 = vsel %vm249, 1, 0
        %v266 = vsel %vm250, 1, 0
        %v267 = vsel %vm251, 1, 0
        %v268 = vsel %vm252, 1, 0
        %v269 = vsel %vm253, 1, 0
        %v270 = vsel %vm254, 1, 0
        %v271 = vsel %vm255, 1, 0
        %v272 = vsel %vm256, 1, 0
        %v273 = vsel %vm257, 1, 0
        %v274 = vsel %vm258, 1, 0
        %v275 = vcvt.s32.f32 %v259
        %v276 = vcvt.s32.f32 %v260
        %v277 = vcvt.s32.f32 %v261
        %v278 = vcvt.s32.f32 %v262
        %v279 = vcvt.s32.f32 %v263
        %v280 = vcvt.s32.f32 %v264
        %v281 = vcvt.s32.f32 %v265
        %v282 = vcvt.s32.f32 %v266
        %v283 = vcvt.s32.f32 %v267
        %v284 = vcvt.s32.f32 %v268
        %v285 = vcvt.s32.f32 %v269
        %v286 = vcvt.s32.f32 %v270
        %v287 = vcvt.s32.f32 %v271
        %v288 = vcvt.s32.f32 %v272
        %v289 = vcvt.s32.f32 %v273
        %v290 = vcvt.s32.f32 %v274
        %v291 = vpack.c.bf16 %v283, %v275
        %v292 = vpack.c.bf16 %v284, %v276
        %v293 = vpack.c.bf16 %v285, %v277
        %v294 = vpack.c.bf16 %v286, %v278
        %v295 = vpack.c.bf16 %v287, %v279
        %v296 = vpack.c.bf16 %v288, %v280
        %v297 = vpack.c.bf16 %v289, %v281
        %v298 = vpack.c.bf16 %v290, %v282
        %v299 = vld [vmem:[#allocation5] sm:$0xf]
        %v300 = vld [vmem:[#allocation5 + $0x4] sm:$0xf]
        %v301 = vld [vmem:[#allocation5 + $0x8] sm:$0xf]
        %v302 = vld [vmem:[#allocation5 + $0xc] sm:$0xf]
        %v303 = vld [vmem:[#allocation5 + $0x10] sm:$0xf]
        %v304 = vld [vmem:[#allocation5 + $0x14] sm:$0xf]
        %v305 = vld [vmem:[#allocation5 + $0x18] sm:$0xf]
        %v306 = vld [vmem:[#allocation5 + $0x1c] sm:$0xf]
        %v307 = vld [vmem:[#allocation5 + $0x20] sm:$0xf]
        %v308 = vld [vmem:[#allocation5 + $0x24] sm:$0xf]
        %v309 = vld [vmem:[#allocation5 + $0x28] sm:$0xf]
        %v310 = vld [vmem:[#allocation5 + $0x2c] sm:$0xf]
        %v311 = vld [vmem:[#allocation5 + $0x30] sm:$0xf]
        %v312 = vld [vmem:[#allocation5 + $0x34] sm:$0xf]
        %v313 = vld [vmem:[#allocation5 + $0x38] sm:$0xf]
        %v314 = vld [vmem:[#allocation5 + $0x3c] sm:$0xf]
        %v315 = vld [vmem:[#allocation5 + $0x40] sm:$0xf]
        %v316 = vld [vmem:[#allocation5 + $0x44] sm:$0xf]
        %v317 = vld [vmem:[#allocation5 + $0x48] sm:$0xf]
        %v318 = vld [vmem:[#allocation5 + $0x4c] sm:$0xf]
        %v319 = vld [vmem:[#allocation5 + $0x50] sm:$0xf]
        %v320 = vld [vmem:[#allocation5 + $0x54] sm:$0xf]
        %v321 = vld [vmem:[#allocation5 + $0x58] sm:$0xf]
        %v322 = vld [vmem:[#allocation5 + $0x5c] sm:$0xf]
        %v323 = vld [vmem:[#allocation5 + $0x60] sm:$0xf]
        %v324 = vld [vmem:[#allocation5 + $0x64] sm:$0xf]
        %v325 = vld [vmem:[#allocation5 + $0x68] sm:$0xf]
        %v326 = vld [vmem:[#allocation5 + $0x6c] sm:$0xf]
        %v327 = vld [vmem:[#allocation5 + $0x70] sm:$0xf]
        %v328 = vld [vmem:[#allocation5 + $0x74] sm:$0xf]
        %v329 = vld [vmem:[#allocation5 + $0x78] sm:$0xf]
        %v330 = vld [vmem:[#allocation5 + $0x7c] sm:$0xf]
        %v331 = vld [vmem:[#allocation5 + $0x80] sm:$0xf]
        %v332 = vld [vmem:[#allocation5 + $0x84] sm:$0xf]
        %v333 = vld [vmem:[#allocation5 + $0x88] sm:$0xf]
        %v334 = vld [vmem:[#allocation5 + $0x8c] sm:$0xf]
        %v335 = vld [vmem:[#allocation5 + $0x90] sm:$0xf]
        %v336 = vld [vmem:[#allocation5 + $0x94] sm:$0xf]
        %v337 = vld [vmem:[#allocation5 + $0x98] sm:$0xf]
        %v338 = vld [vmem:[#allocation5 + $0x9c] sm:$0xf]
        %v339 = vld [vmem:[#allocation5 + $0xa0] sm:$0xf]
        %v340 = vld [vmem:[#allocation5 + $0xa4] sm:$0xf]
        %v341 = vld [vmem:[#allocation5 + $0xa8] sm:$0xf]
        %v342 = vld [vmem:[#allocation5 + $0xac] sm:$0xf]
        %v343 = vld [vmem:[#allocation5 + $0xb0] sm:$0xf]
        %v344 = vld [vmem:[#allocation5 + $0xb4] sm:$0xf]
        %v345 = vld [vmem:[#allocation5 + $0xb8] sm:$0xf]
        %v346 = vld [vmem:[#allocation5 + $0xbc] sm:$0xf]
        %v347 = vld [vmem:[#allocation5 + $0xc0] sm:$0xf]
        %v348 = vld [vmem:[#allocation5 + $0xc4] sm:$0xf]
        %v349 = vld [vmem:[#allocation5 + $0xc8] sm:$0xf]
        %v350 = vld [vmem:[#allocation5 + $0xcc] sm:$0xf]
        %v351 = vld [vmem:[#allocation5 + $0xd0] sm:$0xf]
        %v352 = vld [vmem:[#allocation5 + $0xd4] sm:$0xf]
        %v353 = vld [vmem:[#allocation5 + $0xd8] sm:$0xf]
        %v354 = vld [vmem:[#allocation5 + $0xdc] sm:$0xf]
        %v355 = vld [vmem:[#allocation5 + $0xe0] sm:$0xf]
        %v356 = vld [vmem:[#allocation5 + $0xe4] sm:$0xf]
        %v357 = vld [vmem:[#allocation5 + $0xe8] sm:$0xf]
        %v358 = vld [vmem:[#allocation5 + $0xec] sm:$0xf]
        %v359 = vld [vmem:[#allocation5 + $0xf0] sm:$0xf]
        %v360 = vld [vmem:[#allocation5 + $0xf4] sm:$0xf]
        %v361 = vld [vmem:[#allocation5 + $0xf8] sm:$0xf]
        %v362 = vld [vmem:[#allocation5 + $0xfc] sm:$0xf]
        %v363 = vld [vmem:[#allocation5 + $0x100] sm:$0xf]
        %v364 = vld [vmem:[#allocation5 + $0x104] sm:$0xf]
        %v365 = vld [vmem:[#allocation5 + $0x108] sm:$0xf]
        %v366 = vld [vmem:[#allocation5 + $0x10c] sm:$0xf]
        %v367 = vld [vmem:[#allocation5 + $0x110] sm:$0xf]
        %v368 = vld [vmem:[#allocation5 + $0x114] sm:$0xf]
        %v369 = vld [vmem:[#allocation5 + $0x118] sm:$0xf]
        %v370 = vld [vmem:[#allocation5 + $0x11c] sm:$0xf]
        %v371 = vld [vmem:[#allocation5 + $0x120] sm:$0xf]
        %v372 = vld [vmem:[#allocation5 + $0x124] sm:$0xf]
        %v373 = vld [vmem:[#allocation5 + $0x128] sm:$0xf]
        %v374 = vld [vmem:[#allocation5 + $0x12c] sm:$0xf]
        %v375 = vld [vmem:[#allocation5 + $0x130] sm:$0xf]
        %v376 = vld [vmem:[#allocation5 + $0x134] sm:$0xf]
        %v377 = vld [vmem:[#allocation5 + $0x138] sm:$0xf]
        %v378 = vld [vmem:[#allocation5 + $0x13c] sm:$0xf]
        %v379 = vld [vmem:[#allocation5 + $0x140] sm:$0xf]
        %v380 = vld [vmem:[#allocation5 + $0x144] sm:$0xf]
        %v381 = vld [vmem:[#allocation5 + $0x148] sm:$0xf]
        %v382 = vld [vmem:[#allocation5 + $0x14c] sm:$0xf]
        %v383 = vld [vmem:[#allocation5 + $0x150] sm:$0xf]
        %v384 = vld [vmem:[#allocation5 + $0x154] sm:$0xf]
        %v385 = vld [vmem:[#allocation5 + $0x158] sm:$0xf]
        %v386 = vld [vmem:[#allocation5 + $0x15c] sm:$0xf]
        %v387 = vld [vmem:[#allocation5 + $0x160] sm:$0xf]
        %v388 = vld [vmem:[#allocation5 + $0x164] sm:$0xf]
        %v389 = vld [vmem:[#allocation5 + $0x168] sm:$0xf]
        %v390 = vld [vmem:[#allocation5 + $0x16c] sm:$0xf]
        %v391 = vld [vmem:[#allocation5 + $0x170] sm:$0xf]
        %v392 = vld [vmem:[#allocation5 + $0x174] sm:$0xf]
        %v393 = vld [vmem:[#allocation5 + $0x178] sm:$0xf]
        %v394 = vld [vmem:[#allocation5 + $0x17c] sm:$0xf]
        %v395 = vld [vmem:[#allocation5 + $0x180] sm:$0xf]
        %v396 = vld [vmem:[#allocation5 + $0x184] sm:$0xf]
        %v397 = vld [vmem:[#allocation5 + $0x188] sm:$0xf]
        %v398 = vld [vmem:[#allocation5 + $0x18c] sm:$0xf]
        %v399 = vld [vmem:[#allocation5 + $0x190] sm:$0xf]
        %v400 = vld [vmem:[#allocation5 + $0x194] sm:$0xf]
        %v401 = vld [vmem:[#allocation5 + $0x198] sm:$0xf]
        %v402 = vld [vmem:[#allocation5 + $0x19c] sm:$0xf]
        %v403 = vld [vmem:[#allocation5 + $0x1a0] sm:$0xf]
        %v404 = vld [vmem:[#allocation5 + $0x1a4] sm:$0xf]
        %v405 = vld [vmem:[#allocation5 + $0x1a8] sm:$0xf]
        %v406 = vld [vmem:[#allocation5 + $0x1ac] sm:$0xf]
        %v407 = vld [vmem:[#allocation5 + $0x1b0] sm:$0xf]
        %v408 = vld [vmem:[#allocation5 + $0x1b4] sm:$0xf]
        %v409 = vld [vmem:[#allocation5 + $0x1b8] sm:$0xf]
        %v410 = vld [vmem:[#allocation5 + $0x1bc] sm:$0xf]
        %v411 = vld [vmem:[#allocation5 + $0x1c0] sm:$0xf]
        %v412 = vld [vmem:[#allocation5 + $0x1c4] sm:$0xf]
        %v413 = vld [vmem:[#allocation5 + $0x1c8] sm:$0xf]
        %v414 = vld [vmem:[#allocation5 + $0x1cc] sm:$0xf]
        %v415 = vld [vmem:[#allocation5 + $0x1d0] sm:$0xf]
        %v416 = vld [vmem:[#allocation5 + $0x1d4] sm:$0xf]
        %v417 = vld [vmem:[#allocation5 + $0x1d8] sm:$0xf]
        %v418 = vld [vmem:[#allocation5 + $0x1dc] sm:$0xf]
        %v419 = vld [vmem:[#allocation5 + $0x1e0] sm:$0xf]
        %v420 = vld [vmem:[#allocation5 + $0x1e4] sm:$0xf]
        %v421 = vld [vmem:[#allocation5 + $0x1e8] sm:$0xf]
        %v422 = vld [vmem:[#allocation5 + $0x1ec] sm:$0xf]
        %v423 = vld [vmem:[#allocation5 + $0x1f0] sm:$0xf]
        %v424 = vld [vmem:[#allocation5 + $0x1f4] sm:$0xf]
        %v425 = vld [vmem:[#allocation5 + $0x1f8] sm:$0xf]
        %v426 = vld [vmem:[#allocation5 + $0x1fc] sm:$0xf]
        %v427 = vld [vmem:[%s2] sm:$0x1]
        %v429 = vperm.slane %v427, 0
        %v559 = vunpack.c.l.b16 %v299
        %v560 = vunpack.c.l.b16 %v300
        %v561 = vunpack.c.l.b16 %v301
        %v562 = vunpack.c.l.b16 %v302
        %v563 = vunpack.c.l.b16 %v303
        %v564 = vunpack.c.l.b16 %v304
        %v565 = vunpack.c.l.b16 %v305
        %v566 = vunpack.c.l.b16 %v306
        %v567 = vunpack.c.l.b16 %v307
        %v568 = vunpack.c.l.b16 %v308
        %v569 = vunpack.c.l.b16 %v309
        %v570 = vunpack.c.l.b16 %v310
        %v571 = vunpack.c.l.b16 %v311
        %v572 = vunpack.c.l.b16 %v312
        %v573 = vunpack.c.l.b16 %v313
        %v574 = vunpack.c.l.b16 %v314
        %v575 = vunpack.c.l.b16 %v315
        %v576 = vunpack.c.l.b16 %v316
        %v577 = vunpack.c.l.b16 %v317
        %v578 = vunpack.c.l.b16 %v318
        %v579 = vunpack.c.l.b16 %v319
        %v580 = vunpack.c.l.b16 %v320
        %v581 = vunpack.c.l.b16 %v321
        %v582 = vunpack.c.l.b16 %v322
        %v583 = vunpack.c.l.b16 %v323
        %v584 = vunpack.c.l.b16 %v324
        %v585 = vunpack.c.l.b16 %v325
        %v586 = vunpack.c.l.b16 %v326
        %v587 = vunpack.c.l.b16 %v327
        %v588 = vunpack.c.l.b16 %v328
        %v589 = vunpack.c.l.b16 %v329
        %v590 = vunpack.c.l.b16 %v330
        %v591 = vunpack.c.l.b16 %v331
        %v592 = vunpack.c.l.b16 %v332
        %v593 = vunpack.c.l.b16 %v333
        %v594 = vunpack.c.l.b16 %v334
        %v595 = vunpack.c.l.b16 %v335
        %v596 = vunpack.c.l.b16 %v336
        %v597 = vunpack.c.l.b16 %v337
        %v598 = vunpack.c.l.b16 %v338
        %v599 = vunpack.c.l.b16 %v339
        %v600 = vunpack.c.l.b16 %v340
        %v601 = vunpack.c.l.b16 %v341
        %v602 = vunpack.c.l.b16 %v342
        %v603 = vunpack.c.l.b16 %v343
        %v604 = vunpack.c.l.b16 %v344
        %v605 = vunpack.c.l.b16 %v345
        %v606 = vunpack.c.l.b16 %v346
        %v607 = vunpack.c.l.b16 %v347
        %v608 = vunpack.c.l.b16 %v348
        %v609 = vunpack.c.l.b16 %v349
        %v610 = vunpack.c.l.b16 %v350
        %v611 = vunpack.c.l.b16 %v351
        %v612 = vunpack.c.l.b16 %v352
        %v613 = vunpack.c.l.b16 %v353
        %v614 = vunpack.c.l.b16 %v354
        %v615 = vunpack.c.l.b16 %v355
        %v616 = vunpack.c.l.b16 %v356
        %v617 = vunpack.c.l.b16 %v357
        %v618 = vunpack.c.l.b16 %v358
        %v619 = vunpack.c.l.b16 %v359
        %v620 = vunpack.c.l.b16 %v360
        %v621 = vunpack.c.l.b16 %v361
        %v622 = vunpack.c.l.b16 %v362
        %v623 = vunpack.c.l.b16 %v363
        %v624 = vunpack.c.l.b16 %v364
        %v625 = vunpack.c.l.b16 %v365
        %v626 = vunpack.c.l.b16 %v366
        %v627 = vunpack.c.l.b16 %v367
        %v628 = vunpack.c.l.b16 %v368
        %v629 = vunpack.c.l.b16 %v369
        %v630 = vunpack.c.l.b16 %v370
        %v631 = vunpack.c.l.b16 %v371
        %v632 = vunpack.c.l.b16 %v372
        %v633 = vunpack.c.l.b16 %v373
        %v634 = vunpack.c.l.b16 %v374
        %v635 = vunpack.c.l.b16 %v375
        %v636 = vunpack.c.l.b16 %v376
        %v637 = vunpack.c.l.b16 %v377
        %v638 = vunpack.c.l.b16 %v378
        %v639 = vunpack.c.l.b16 %v379
        %v640 = vunpack.c.l.b16 %v380
        %v641 = vunpack.c.l.b16 %v381
        %v642 = vunpack.c.l.b16 %v382
        %v643 = vunpack.c.l.b16 %v383
        %v644 = vunpack.c.l.b16 %v384
        %v645 = vunpack.c.l.b16 %v385
        %v646 = vunpack.c.l.b16 %v386
        %v647 = vunpack.c.l.b16 %v387
        %v648 = vunpack.c.l.b16 %v388
        %v649 = vunpack.c.l.b16 %v389
        %v650 = vunpack.c.l.b16 %v390
        %v651 = vunpack.c.l.b16 %v391
        %v652 = vunpack.c.l.b16 %v392
        %v653 = vunpack.c.l.b16 %v393
        %v654 = vunpack.c.l.b16 %v394
        %v655 = vunpack.c.l.b16 %v395
        %v656 = vunpack.c.l.b16 %v396
        %v657 = vunpack.c.l.b16 %v397
        %v658 = vunpack.c.l.b16 %v398
        %v659 = vunpack.c.l.b16 %v399
        %v660 = vunpack.c.l.b16 %v400
        %v661 = vunpack.c.l.b16 %v401
        %v662 = vunpack.c.l.b16 %v402
        %v663 = vunpack.c.l.b16 %v403
        %v664 = vunpack.c.l.b16 %v404
        %v665 = vunpack.c.l.b16 %v405
        %v666 = vunpack.c.l.b16 %v406
        %v667 = vunpack.c.l.b16 %v407
        %v668 = vunpack.c.l.b16 %v408
        %v669 = vunpack.c.l.b16 %v409
        %v670 = vunpack.c.l.b16 %v410
        %v671 = vunpack.c.l.b16 %v411
        %v672 = vunpack.c.l.b16 %v412
        %v673 = vunpack.c.l.b16 %v413
        %v674 = vunpack.c.l.b16 %v414
        %v675 = vunpack.c.l.b16 %v415
        %v676 = vunpack.c.l.b16 %v416
        %v677 = vunpack.c.l.b16 %v417
        %v678 = vunpack.c.l.b16 %v418
        %v679 = vunpack.c.l.b16 %v419
        %v680 = vunpack.c.l.b16 %v420
        %v681 = vunpack.c.l.b16 %v421
        %v682 = vunpack.c.l.b16 %v422
        %v683 = vunpack.c.l.b16 %v423
        %v684 = vunpack.c.l.b16 %v424
        %v685 = vunpack.c.l.b16 %v425
        %v686 = vunpack.c.l.b16 %v426
        %v687 = vpack.c.b16 %v560, %v559
        %v688 = vpack.c.b16 %v562, %v561
        %v689 = vpack.c.b16 %v564, %v563
        %v690 = vpack.c.b16 %v566, %v565
        %v691 = vpack.c.b16 %v568, %v567
        %v692 = vpack.c.b16 %v570, %v569
        %v693 = vpack.c.b16 %v572, %v571
        %v694 = vpack.c.b16 %v574, %v573
        %v695 = vpack.c.b16 %v576, %v575
        %v696 = vpack.c.b16 %v578, %v577
        %v697 = vpack.c.b16 %v580, %v579
        %v698 = vpack.c.b16 %v582, %v581
        %v699 = vpack.c.b16 %v584, %v583
        %v700 = vpack.c.b16 %v586, %v585
        %v701 = vpack.c.b16 %v588, %v587
        %v702 = vpack.c.b16 %v590, %v589
        %v703 = vpack.c.b16 %v592, %v591
        %v704 = vpack.c.b16 %v594, %v593
        %v705 = vpack.c.b16 %v596, %v595
        %v706 = vpack.c.b16 %v598, %v597
        %v707 = vpack.c.b16 %v600, %v599
        %v708 = vpack.c.b16 %v602, %v601
        %v709 = vpack.c.b16 %v604, %v603
        %v710 = vpack.c.b16 %v606, %v605
        %v711 = vpack.c.b16 %v608, %v607
        %v712 = vpack.c.b16 %v610, %v609
        %v713 = vpack.c.b16 %v612, %v611
        %v714 = vpack.c.b16 %v614, %v613
        %v715 = vpack.c.b16 %v616, %v615
        %v716 = vpack.c.b16 %v618, %v617
        %v717 = vpack.c.b16 %v620, %v619
        %v718 = vpack.c.b16 %v622, %v621
        %v719 = vpack.c.b16 %v624, %v623
        %v720 = vpack.c.b16 %v626, %v625
        %v721 = vpack.c.b16 %v628, %v627
        %v722 = vpack.c.b16 %v630, %v629
        %v723 = vpack.c.b16 %v632, %v631
        %v724 = vpack.c.b16 %v634, %v633
        %v725 = vpack.c.b16 %v636, %v635
        %v726 = vpack.c.b16 %v638, %v637
        %v727 = vpack.c.b16 %v640, %v639
        %v728 = vpack.c.b16 %v642, %v641
        %v729 = vpack.c.b16 %v644, %v643
        %v730 = vpack.c.b16 %v646, %v645
        %v731 = vpack.c.b16 %v648, %v647
        %v732 = vpack.c.b16 %v650, %v649
        %v733 = vpack.c.b16 %v652, %v651
        %v734 = vpack.c.b16 %v654, %v653
        %v735 = vpack.c.b16 %v656, %v655
        %v736 = vpack.c.b16 %v658, %v657
        %v737 = vpack.c.b16 %v660, %v659
        %v738 = vpack.c.b16 %v662, %v661
        %v739 = vpack.c.b16 %v664, %v663
        %v740 = vpack.c.b16 %v666, %v665
        %v741 = vpack.c.b16 %v668, %v667
        %v742 = vpack.c.b16 %v670, %v669
        %v743 = vpack.c.b16 %v672, %v671
        %v744 = vpack.c.b16 %v674, %v673
        %v745 = vpack.c.b16 %v676, %v675
        %v746 = vpack.c.b16 %v678, %v677
        %v747 = vpack.c.b16 %v680, %v679
        %v748 = vpack.c.b16 %v682, %v681
        %v749 = vpack.c.b16 %v684, %v683
        %v750 = vpack.c.b16 %v686, %v685
        %815 = vmatpush.bf16.msra.mxu0 %v694
        %816 = vmatpush.bf16.msra.mxu0 %v693
        %817 = vmatpush.bf16.msra.mxu0 %v692
        %818 = vmatpush.bf16.msra.mxu0 %v691
        %819 = vmatpush.bf16.msra.mxu0 %v690
        %820 = vmatpush.bf16.msra.mxu0 %v689
        %821 = vmatpush.bf16.msra.mxu0 %v688
        %822 = vmatpush.bf16.msra.mxu0 %v687
        %823 = vmatmul.bf16.gmra.mxu0 %v291
        %v824 = vpop.f32.mrf.mxu0
        %v825 = vadd.f32 %v429, %v824
        %v826 = vpop.f32.mrf.mxu0
        %v827 = vadd.f32 %v429, %v826
        %828 = vdwg.mxu0
        %829 = vmatpush.bf16.msra.mxu0 %v702
        %830 = vmatpush.bf16.msra.mxu0 %v701
        %831 = vmatpush.bf16.msra.mxu0 %v700
        %832 = vmatpush.bf16.msra.mxu0 %v699
        %833 = vmatpush.bf16.msra.mxu0 %v698
        %834 = vmatpush.bf16.msra.mxu0 %v697
        %835 = vmatpush.bf16.msra.mxu0 %v696
        %836 = vmatpush.bf16.msra.mxu0 %v695
        %837 = vmatmul.bf16.gmra.mxu0 %v292
        %v838 = vpop.f32.mrf.mxu0
        %v839 = vadd.f32 %v825, %v838
        %v840 = vpop.f32.mrf.mxu0
        %v841 = vadd.f32 %v827, %v840
        %842 = vdwg.mxu0
        %843 = vmatpush.bf16.msra.mxu0 %v710
        %844 = vmatpush.bf16.msra.mxu0 %v709
        %845 = vmatpush.bf16.msra.mxu0 %v708
        %846 = vmatpush.bf16.msra.mxu0 %v707
        %847 = vmatpush.bf16.msra.mxu0 %v706
        %848 = vmatpush.bf16.msra.mxu0 %v705
        %849 = vmatpush.bf16.msra.mxu0 %v704
        %850 = vmatpush.bf16.msra.mxu0 %v703
        %851 = vmatmul.bf16.gmra.mxu0 %v293
        %v852 = vpop.f32.mrf.mxu0
        %v853 = vadd.f32 %v839, %v852
        %v854 = vpop.f32.mrf.mxu0
        %v855 = vadd.f32 %v841, %v854
        %856 = vdwg.mxu0
        %857 = vmatpush.bf16.msra.mxu0 %v718
        %858 = vmatpush.bf16.msra.mxu0 %v717
        %859 = vmatpush.bf16.msra.mxu0 %v716
        %860 = vmatpush.bf16.msra.mxu0 %v715
        %861 = vmatpush.bf16.msra.mxu0 %v714
        %862 = vmatpush.bf16.msra.mxu0 %v713
        %863 = vmatpush.bf16.msra.mxu0 %v712
        %864 = vmatpush.bf16.msra.mxu0 %v711
        %865 = vmatmul.bf16.gmra.mxu0 %v294
        %v866 = vpop.f32.mrf.mxu0
        %v867 = vadd.f32 %v853, %v866
        %v868 = vpop.f32.mrf.mxu0
        %v869 = vadd.f32 %v855, %v868
        %870 = vdwg.mxu0
        %871 = vmatpush.bf16.msra.mxu0 %v726
        %872 = vmatpush.bf16.msra.mxu0 %v725
        %873 = vmatpush.bf16.msra.mxu0 %v724
        %874 = vmatpush.bf16.msra.mxu0 %v723
        %875 = vmatpush.bf16.msra.mxu0 %v722
        %876 = vmatpush.bf16.msra.mxu0 %v721
        %877 = vmatpush.bf16.msra.mxu0 %v720
        %878 = vmatpush.bf16.msra.mxu0 %v719
        %879 = vmatmul.bf16.gmra.mxu0 %v295
        %v880 = vpop.f32.mrf.mxu0
        %v881 = vadd.f32 %v867, %v880
        %v882 = vpop.f32.mrf.mxu0
        %v883 = vadd.f32 %v869, %v882
        %884 = vdwg.mxu0
        %885 = vmatpush.bf16.msra.mxu0 %v734
        %886 = vmatpush.bf16.msra.mxu0 %v733
        %887 = vmatpush.bf16.msra.mxu0 %v732
        %888 = vmatpush.bf16.msra.mxu0 %v731
        %889 = vmatpush.bf16.msra.mxu0 %v730
        %890 = vmatpush.bf16.msra.mxu0 %v729
        %891 = vmatpush.bf16.msra.mxu0 %v728
        %892 = vmatpush.bf16.msra.mxu0 %v727
        %893 = vmatmul.bf16.gmra.mxu0 %v296
        %v894 = vpop.f32.mrf.mxu0
        %v895 = vadd.f32 %v881, %v894
        %v896 = vpop.f32.mrf.mxu0
        %v897 = vadd.f32 %v883, %v896
        %898 = vdwg.mxu0
        %899 = vmatpush.bf16.msra.mxu0 %v742
        %900 = vmatpush.bf16.msra.mxu0 %v741
        %901 = vmatpush.bf16.msra.mxu0 %v740
        %902 = vmatpush.bf16.msra.mxu0 %v739
        %903 = vmatpush.bf16.msra.mxu0 %v738
        %904 = vmatpush.bf16.msra.mxu0 %v737
        %905 = vmatpush.bf16.msra.mxu0 %v736
        %906 = vmatpush.bf16.msra.mxu0 %v735
        %907 = vmatmul.bf16.gmra.mxu0 %v297
        %v908 = vpop.f32.mrf.mxu0
        %v909 = vadd.f32 %v895, %v908
        %v910 = vpop.f32.mrf.mxu0
        %v911 = vadd.f32 %v897, %v910
        %912 = vdwg.mxu0
        %913 = vmatpush.bf16.msra.mxu0 %v750
        %914 = vmatpush.bf16.msra.mxu0 %v749
        %915 = vmatpush.bf16.msra.mxu0 %v748
        %916 = vmatpush.bf16.msra.mxu0 %v747
        %917 = vmatpush.bf16.msra.mxu0 %v746
        %918 = vmatpush.bf16.msra.mxu0 %v745
        %919 = vmatpush.bf16.msra.mxu0 %v744
        %920 = vmatpush.bf16.msra.mxu0 %v743
        %921 = vmatmul.bf16.gmra.mxu0 %v298
        %v922 = vpop.f32.mrf.mxu0
        %v923 = vadd.f32 %v909, %v922
        %v924 = vpop.f32.mrf.mxu0
        %v925 = vadd.f32 %v911, %v924
        %926 = vdwg.mxu0
        %vm927 = vcmp.ge.f32.partialorder %v923, 1.0
        %vm928 = vcmp.ge.f32.partialorder %v925, 1.0
        %v929 = vsel %vm927, 1, 0
        %v930 = vsel %vm928, 1, 0
        %v931 = vcvt.s32.f32 %v929
        %v932 = vcvt.s32.f32 %v930
        %v933 = vpack.c.bf16 %v931, %v931
        %v934 = vpack.c.bf16 %v932, %v932
        %935 = vst [vmem:[%s208] sm:$0xf] %v933
        %936 = vst [vmem:[%s208 + $0x4] sm:$0xf] %v934
        %s937 = sand.u32 %s97, 1
        %s938 = scalar_lea.sflag [#allocation4], %s937
        %s939 = sand.u32 %s97, 1
        %s940 = smul.addr %s939, 8
        %s941 = scalar_lea.vmem [#allocation7], %s940
        // Predicated region
        $region41: #{tpu_custom_call.1} parent=31 // pred_check
          %p942 = pneg %p107
        $region42: #{tpu_custom_call.1} parent=31 // pred_check_branch
          %944 = sbr.rel (%p942) target = $region44
        $region43: #{tpu_custom_call.1} parent=31 // pred_region
          %s945 = smul.u32 2, %s21
          %947 = vsyncadd %s938, 0
          %s948 = smul.addr %s945, 4
          %s949 = scalar_lea.hbm %s3, %s948
          %s950 = sshll.u32 %s941, 4
          %s951 = int_to_ptr.vmem [resolvable:$true] %s950
          %s952 = sshll.u32 %s949, 4
          %s953 = int_to_ptr.hbm [resolvable:$true] %s952
          %958 = dma.vmem_to_hbm [thread:$0]  %s951, 128, %s953, %s938, 64, 64, 4
        $region44: #{tpu_custom_call.1} parent=31 // pred_fallthru
          _
      $region32: #{tpu_custom_call.1} parent=5 // pred_fallthru
        _
      %p959 = scmp.le.s32.totalorder 2, %s16
      // Predicated region
      $region45: #{tpu_custom_call.1} parent=5 // pred_check
        %p960 = pneg %p959
      $region46: #{tpu_custom_call.1} parent=5 // pred_check_branch
        %962 = sbr.rel (%p960) target = $region48
      $region47: #{tpu_custom_call.1} parent=5 // pred_region
        %s963 = ssub.s32 %s16, 2
        // Predicated region
        $region49: #{tpu_custom_call.1} parent=47 // pred_check
          %p964 = pneg %p113
        $region50: #{tpu_custom_call.1} parent=47 // pred_check_branch
          %966 = sbr.rel (%p964) target = $region52
        $region51: #{tpu_custom_call.1} parent=47 // pred_region
          %s967 = sand.u32 %s98, 1
          %s968 = scalar_lea.sflag [#allocation4], %s967
          %s969 = sand.u32 %s98, 1
          %s970 = smul.addr %s969, 8
          %s971 = scalar_lea.vmem [#allocation7], %s970
          %973 = dma.done %s968, 128
        $region52: #{tpu_custom_call.1} parent=47 // pred_fallthru
          _
      $region48: #{tpu_custom_call.1} parent=5 // pred_fallthru
        _
    $region6: #{tpu_custom_call.1} parent=1 // loop_footer
      %s20 = sadd.s32 1, %s16
    $region7: #{tpu_custom_call.1} parent=1 // loop_footer_branch
      %15 = sbr.rel target = $region3
    $region8: #{tpu_custom_call.1} parent=1 // loop_exit
      _
    %974 = vsyncpa [#allocation3], 1
    %s975 = scalar_lea.sflag [#allocation3], 1
    %976 = vsyncpa %s975, 1
    %977 = vsyncpa [#allocation6], 1
    %978 = vsyncpa [#allocation4], 1
    %s979 = scalar_lea.sflag [#allocation4], 1
    %980 = vsyncpa %s979, 1

// kernel: tpu_custom_call.1
$region0: #{tpu_custom_call.1}
  #allocation0 [shape = 'u32[]', space=smem, size = 0x4, offset = 0x4, fixed_abs, tag = 'smem constant byte address 0x4 - core index']
  #allocation1 [shape = 'u32[72,128]{1,0:T(1,128)}', space=vmem, size = 0x9000, scoped, tag = 'internal scratch']
  %s0 = inlined_call_operand.hbm [shape: f32[32,1024], index: 0, kind: input, shape index: {}]
  %s1 = inlined_call_operand.hbm [shape: bf16[1024,128], index: 1, kind: input, shape index: {}]
  %s2 = inlined_call_operand.vmem [shape: f32[1,128], index: 2, kind: input, shape index: {}]
  %s3 = inlined_call_operand.hbm [shape: bf16[32,128], index: 3, kind: output, shape index: {}]
  %s4 = sld [smem:[#allocation0]]
  $region53: #{tpu_custom_call.1} parent=0
    _
  %s6 = ssub.s32 1, %s4
  %s7 = scalar_select 0, %s6, %s4
  $region1: #{tpu_custom_call.1} parent=0
    #allocation2 [shape = 'u8[131072]{0}', space=vmem, size = 0x20000, scoped, tag = 'input window, operand 0']
    #allocation3 [shape = 's32[2]{0}', space=sflag, size = 0x8, scoped, tag = 'scoped memory for tpu_custom_call.1']
    #allocation4 [shape = 's32[2]{0}', space=sflag, size = 0x8, scoped, tag = 'scoped memory for tpu_custom_call.1']
    #allocation5 [shape = 'u8[262144]{0}', space=vmem, size = 0x40000, scoped, tag = 'input window, operand 1, single buffered']
    #allocation6 [shape = 's32[1]{0}', space=sflag, size = 0x4, scoped, tag = 'scoped memory for tpu_custom_call.1']
    #allocation7 [shape = 'u8[8192]{0}', space=vmem, size = 0x2000, scoped, tag = 'output window, operand 0']
    %8 = vsyncpa [#allocation3], 0
    %s9 = scalar_lea.sflag [#allocation3], 1
    %10 = vsyncpa %s9, 0
    %11 = vsyncpa [#allocation6], 0
    %12 = vsyncpa [#allocation4], 0
    %s13 = scalar_lea.sflag [#allocation4], 1
    %14 = vsyncpa %s13, 0
    loop: start=0, step=1, limit=4
    $region2: #{tpu_custom_call.1} parent=1 // loop_pre_header
      _
    $region3: #{tpu_custom_call.1} parent=1 // loop_header
      %s16 = sphi 0, %s20
      %p17 = scmp.ge.s32.totalorder %s16, 4
      %s26 = sphi 0, %s28
      %s29 = sphi 0, %s26
      %s30 = sphi 0, %s29
      %s46 = sphi 0, %s30
      %s50 = sphi 0, %s50
      %s52 = sphi 0, %s50
      %s53 = sphi 0, %s52
      %s67 = sphi 0, %s53
      %s71 = sphi 0, %s71
      %s73 = sphi 0, %s71
      %s74 = sphi 0, %s73
      %s88 = sphi 0, %s74
      %s94 = sphi 0, %s96
      %s97 = sphi 0, %s94
      %s98 = sphi 0, %s97
      %s114 = sphi 0, %s98
    $region4: #{tpu_custom_call.1} parent=1 // loop_header_branch
      %19 = sbr.rel (%p17) target = $region8
    $region5: #{tpu_custom_call.1} parent=1 // loop_body
      %s21 = ssub.s32 %s16, 1
      %s22 = ssub.s32 %s16, 2
      %s23 = sadd.s32 %s16, 1
      %s24 = ssub.s32 %s16, %s23
      %p25 = scmp.eq.s32.totalorder %s24, 0
      %s27 = sadd.s32 %s26, 1
      %s28 = scalar_select %p25, %s26, %s27
      %p31 = pneg %p25
      %p32 = scmp.eq.s32.totalorder %s16, 1
      %p33 = por %p31, %p32
      %p34 = scmp.ne.s32.totalorder %s26, %s29
      %p35 = scmp.eq.s32.totalorder %s16, 0
      %p36 = por %p34, %p35
      %p37 = scmp.ne.s32.totalorder %s26, %s29
      %p38 = scmp.eq.s32.totalorder %s21, 1
      %p39 = por %p37, %p38
      %p40 = scmp.ne.s32.totalorder %s29, %s30
      %p41 = scmp.eq.s32.totalorder %s21, 0
      %p42 = por %p40, %p41
      %p43 = scmp.ne.s32.totalorder %s29, %s30
      %p44 = scmp.eq.s32.totalorder %s22, 1
      %p45 = por %p43, %p44
      %p47 = scmp.ne.s32.totalorder %s30, %s46
      %p48 = scmp.eq.s32.totalorder %s22, 0
      %p49 = por %p47, %p48
      %s51 = sadd.s32 %s50, 1
      %p54 = scmp.eq.s32.totalorder %s16, 1
      %p55 = scmp.ne.s32.totalorder %s50, %s52
      %p56 = scmp.eq.s32.totalorder %s16, 0
      %p57 = por %p55, %p56
      %p58 = scmp.ne.s32.totalorder %s50, %s52
      %p59 = scmp.eq.s32.totalorder %s21, 1
      %p60 = por %p58, %p59
      %p61 = scmp.ne.s32.totalorder %s52, %s53
      %p62 = scmp.eq.s32.totalorder %s21, 0
      %p63 = por %p61, %p62
      %p64 = scmp.ne.s32.totalorder %s52, %s53
      %p65 = scmp.eq.s32.totalorder %s22, 1
      %p66 = por %p64, %p65
      %p68 = scmp.ne.s32.totalorder %s53, %s67
      %p69 = scmp.eq.s32.totalorder %s22, 0
      %p70 = por %p68, %p69
      %s72 = sadd.s32 %s71, 1
      %p75 = scmp.eq.s32.totalorder %s16, 1
      %p76 = scmp.ne.s32.totalorder %s71, %s73
      %p77 = scmp.eq.s32.totalorder %s16, 0
      %p78 = por %p76, %p77
      %p79 = scmp.ne.s32.totalorder %s71, %s73
      %p80 = scmp.eq.s32.totalorder %s21, 1
      %p81 = por %p79, %p80
      %p82 = scmp.ne.s32.totalorder %s73, %s74
      %p83 = scmp.eq.s32.totalorder %s21, 0
      %p84 = por %p82, %p83
      %p85 = scmp.ne.s32.totalorder %s73, %s74
      %p86 = scmp.eq.s32.totalorder %s22, 1
      %p87 = por %p85, %p86
      %p89 = scmp.ne.s32.totalorder %s74, %s88
      %p90 = scmp.eq.s32.totalorder %s22, 0
      %p91 = por %p89, %p90
      %s92 = ssub.s32 %s16, %s23
      %p93 = scmp.eq.s32.totalorder %s92, 0
      %s95 = sadd.s32 %s94, 1
      %s96 = scalar_select %p93, %s94, %s95
      %p99 = pneg %p93
      %p100 = scmp.eq.s32.totalorder %s16, 1
      %p101 = por %p99, %p100
      %p102 = scmp.ne.s32.totalorder %s94, %s97
      %p103 = scmp.eq.s32.totalorder %s16, 0
      %p104 = por %p102, %p103
      %p105 = scmp.ne.s32.totalorder %s94, %s97
      %p106 = scmp.eq.s32.totalorder %s21, 1
      %p107 = por %p105, %p106
      %p108 = scmp.ne.s32.totalorder %s97, %s98
      %p109 = scmp.eq.s32.totalorder %s21, 0
      %p110 = por %p108, %p109
      %p111 = scmp.ne.s32.totalorder %s97, %s98
      %p112 = scmp.eq.s32.totalorder %s22, 1
      %p113 = por %p111, %p112
      %p115 = scmp.ne.s32.totalorder %s98, %s114
      %p116 = scmp.eq.s32.totalorder %s22, 0
      %p117 = por %p115, %p116
      %p118 = scmp.le.s32.totalorder 1, %s16
      %p119 = scmp.lt.s32.totalorder %s16, 3
      %p120 = pnand %p118, %p119
      %p121 = pneg %p120
      // Predicated region
      $region9: #{tpu_custom_call.1} parent=5 // pred_check
        _
      $region10: #{tpu_custom_call.1} parent=5 // pred_check_branch
        %123 = sbr.rel (%p120) target = $region12
      $region11: #{tpu_custom_call.1} parent=5 // pred_region
        %s124 = ssub.s32 %s16, 1
        // Predicated region
        $region13: #{tpu_custom_call.1} parent=11 // pred_check
          %p125 = pneg %p63
        $region14: #{tpu_custom_call.1} parent=11 // pred_check_branch
          %127 = sbr.rel (%p125) target = $region16
        $region15: #{tpu_custom_call.1} parent=11 // pred_region
          %129 = vsyncadd [#allocation6], 0
          %s130 = sshll.u32 %s1, 4
          %s131 = int_to_ptr.hbm [resolvable:$true] %s130
          %s132 = sshll.u32 [#allocation5], 4
          %s133 = int_to_ptr.vmem [resolvable:$true] %s132
          %138 = dma.hbm_to_vmem [thread:$0]  %s131, 8192, %s133, [#allocation6], 64, 64, 4
        $region16: #{tpu_custom_call.1} parent=11 // pred_fallthru
          _
        // Predicated region
        $region17: #{tpu_custom_call.1} parent=11 // pred_check
          %p139 = pneg %p84
        $region18: #{tpu_custom_call.1} parent=11 // pred_check_branch
          %141 = sbr.rel (%p139) target = $region20
        $region19: #{tpu_custom_call.1} parent=11 // pred_region
          _
        $region20: #{tpu_custom_call.1} parent=11 // pred_fallthru
          _
      $region12: #{tpu_custom_call.1} parent=5 // pred_fallthru
        _
      %p142 = scmp.lt.s32.totalorder %s16, 2
      // Predicated region
      $region21: #{tpu_custom_call.1} parent=5 // pred_check
        %p143 = pneg %p142
      $region22: #{tpu_custom_call.1} parent=5 // pred_check_branch
        %145 = sbr.rel (%p143) target = $region24
      $region23: #{tpu_custom_call.1} parent=5 // pred_region
        // Predicated region
        $region25: #{tpu_custom_call.1} parent=23 // pred_check
          %p146 = pneg %p36
        $region26: #{tpu_custom_call.1} parent=23 // pred_check_branch
          %148 = sbr.rel (%p146) target = $region28
        $region27: #{tpu_custom_call.1} parent=23 // pred_region
          %s149 = sand.u32 %s26, 1
          %s150 = scalar_lea.sflag [#allocation3], %s149
          %s151 = sand.u32 %s26, 1
          %s152 = smul.addr %s151, 128
          %s153 = scalar_lea.vmem [#allocation2], %s152
          %s154 = smul.u32 2, %s16
          %156 = vsyncadd %s150, 0
          %s157 = smul.addr %s154, 8
          %s158 = smul.addr %s157, 8
          %s159 = scalar_lea.hbm %s0, %s158
          %s160 = sshll.u32 %s159, 4
          %s161 = int_to_ptr.hbm [resolvable:$true] %s160
          %s162 = sshll.u32 %s153, 4
          %s163 = int_to_ptr.vmem [resolvable:$true] %s162
          %168 = dma.hbm_to_vmem [thread:$0]  %s161, 2048, %s163, %s150, 1024, 1024, 64
        $region28: #{tpu_custom_call.1} parent=23 // pred_fallthru
          _
      $region24: #{tpu_custom_call.1} parent=5 // pred_fallthru
        _
      %p169 = scmp.le.s32.totalorder 1, %s16
      %p170 = scmp.lt.s32.totalorder %s16, 3
      %p171 = pnand %p169, %p170
      %p172 = pneg %p171
      // Predicated region
      $region29: #{tpu_custom_call.1} parent=5 // pred_check
        _
      $region30: #{tpu_custom_call.1} parent=5 // pred_check_branch
        %174 = sbr.rel (%p171) target = $region32
      $region31: #{tpu_custom_call.1} parent=5 // pred_region
        %s175 = ssub.s32 %s16, 1
        %s176 = sand.u32 %s29, 1
        %s177 = scalar_lea.sflag [#allocation3], %s176
        %s178 = sand.u32 %s29, 1
        %s179 = smul.addr %s178, 128
        %s180 = scalar_lea.vmem [#allocation2], %s179
        // Predicated region
        $region33: #{tpu_custom_call.1} parent=31 // pred_check
          %p181 = pneg %p42
        $region34: #{tpu_custom_call.1} parent=31 // pred_check_branch
          %183 = sbr.rel (%p181) target = $region36
        $region35: #{tpu_custom_call.1} parent=31 // pred_region
          %185 = dma.done %s177, 2048
        $region36: #{tpu_custom_call.1} parent=31 // pred_fallthru
          _
        // Predicated region
        $region37: #{tpu_custom_call.1} parent=31 // pred_check
          %p186 = pneg %p63
        $region38: #{tpu_custom_call.1} parent=31 // pred_check_branch
          %188 = sbr.rel (%p186) target = $region40
        $region39: #{tpu_custom_call.1} parent=31 // pred_region
          %190 = dma.done [#allocation6], 8192
        $region40: #{tpu_custom_call.1} parent=31 // pred_fallthru
          _
        %s191 = sand.u32 %s29, 1
        %s192 = scalar_lea.sflag [#allocation3], %s191
        %s193 = sand.u32 %s29, 1
        %s194 = smul.addr %s193, 128
        %s195 = scalar_lea.vmem [#allocation2], %s194
        %p196 = pneg %p42
        %p197 = pneg %p39
        %p198 = pneg %p63
        %p199 = pneg %p60
        %p200 = pneg %p84
        %p201 = pneg %p81
        %p202 = pneg %p110
        %p203 = pneg %p107
        %s204 = sand.u32 %s97, 1
        %s205 = scalar_lea.sflag [#allocation4], %s204
        %s206 = sand.u32 %s97, 1
        %s207 = smul.addr %s206, 8
        %s208 = scalar_lea.vmem [#allocation7], %s207
        %s209 = smul.u32 2, %s21
        %s210 = smul.u32 2, %s21
        %v211 = vld [vmem:[%s180] sm:$0xff]
        %v212 = vld [vmem:[%s180 + $0x8] sm:$0xff]
        %v213 = vld [vmem:[%s180 + $0x10] sm:$0xff]
        %v214 = vld [vmem:[%s180 + $0x18] sm:$0xff]
        %v215 = vld [vmem:[%s180 + $0x20] sm:$0xff]
        %v216 = vld [vmem:[%s180 + $0x28] sm:$0xff]
        %v217 = vld [vmem:[%s180 + $0x30] sm:$0xff]
        %v218 = vld [vmem:[%s180 + $0x38] sm:$0xff]
        %v219 = vld [vmem:[%s180 + $0x40] sm:$0xff]
        %v220 = vld [vmem:[%s180 + $0x48] sm:$0xff]
        %v221 = vld [vmem:[%s180 + $0x50] sm:$0xff]
        %v222 = vld [vmem:[%s180 + $0x58] sm:$0xff]
        %v223 = vld [vmem:[%s180 + $0x60] sm:$0xff]
        %v224 = vld [vmem:[%s180 + $0x68] sm:$0xff]
        %v225 = vld [vmem:[%s180 + $0x70] sm:$0xff]
        %v226 = vld [vmem:[%s180 + $0x78] sm:$0xff]
        %v227 = vmul.f32 %v211, 100.0
        %v228 = vmul.f32 %v212, 100.0
        %v229 = vmul.f32 %v213, 100.0
        %v230 = vmul.f32 %v214, 100.0
        %v231 = vmul.f32 %v215, 100.0
        %v232 = vmul.f32 %v216, 100.0
        %v233 = vmul.f32 %v217, 100.0
        %v234 = vmul.f32 %v218, 100.0
        %v235 = vmul.f32 %v219, 100.0
        %v236 = vmul.f32 %v220, 100.0
        %v237 = vmul.f32 %v221, 100.0
        %v238 = vmul.f32 %v222, 100.0
        %v239 = vmul.f32 %v223, 100.0
        %v240 = vmul.f32 %v224, 100.0
        %v241 = vmul.f32 %v225, 100.0
        %v242 = vmul.f32 %v226, 100.0
        %vm243 = vcmp.ge.f32.partialorder %v227, 99.5
        %vm244 = vcmp.ge.f32.partialorder %v228, 99.5
        %vm245 = vcmp.ge.f32.partialorder %v229, 99.5
        %vm246 = vcmp.ge.f32.partialorder %v230, 99.5
        %vm247 = vcmp.ge.f32.partialorder %v231, 99.5
        %vm248 = vcmp.ge.f32.partialorder %v232, 99.5
        %vm249 = vcmp.ge.f32.partialorder %v233, 99.5
        %vm250 = vcmp.ge.f32.partialorder %v234, 99.5
        %vm251 = vcmp.ge.f32.partialorder %v235, 99.5
        %vm252 = vcmp.ge.f32.partialorder %v236, 99.5
        %vm253 = vcmp.ge.f32.partialorder %v237, 99.5
        %vm254 = vcmp.ge.f32.partialorder %v238, 99.5
        %vm255 = vcmp.ge.f32.partialorder %v239, 99.5
        %vm256 = vcmp.ge.f32.partialorder %v240, 99.5
        %vm257 = vcmp.ge.f32.partialorder %v241, 99.5
        %vm258 = vcmp.ge.f32.partialorder %v242, 99.5
        %v259 = vsel %vm243, 1, 0
        %v260 = vsel %vm244, 1, 0
        %v261 = vsel %vm245, 1, 0
        %v262 = vsel %vm246, 1, 0
        %v263 = vsel %vm247, 1, 0
        %v264 = vsel %vm248, 1, 0
        %v265 = vsel %vm249, 1, 0
        %v266 = vsel %vm250, 1, 0
        %v267 = vsel %vm251, 1, 0
        %v268 = vsel %vm252, 1, 0
        %v269 = vsel %vm253, 1, 0
        %v270 = vsel %vm254, 1, 0
        %v271 = vsel %vm255, 1, 0
        %v272 = vsel %vm256, 1, 0
        %v273 = vsel %vm257, 1, 0
        %v274 = vsel %vm258, 1, 0
        %v275 = vcvt.s32.f32 %v259
        %v276 = vcvt.s32.f32 %v260
        %v277 = vcvt.s32.f32 %v261
        %v278 = vcvt.s32.f32 %v262
        %v279 = vcvt.s32.f32 %v263
        %v280 = vcvt.s32.f32 %v264
        %v281 = vcvt.s32.f32 %v265
        %v282 = vcvt.s32.f32 %v266
        %v283 = vcvt.s32.f32 %v267
        %v284 = vcvt.s32.f32 %v268
        %v285 = vcvt.s32.f32 %v269
        %v286 = vcvt.s32.f32 %v270
        %v287 = vcvt.s32.f32 %v271
        %v288 = vcvt.s32.f32 %v272
        %v289 = vcvt.s32.f32 %v273
        %v290 = vcvt.s32.f32 %v274
        %v291 = vpack.c.bf16 %v283, %v275
        %v292 = vpack.c.bf16 %v284, %v276
        %v293 = vpack.c.bf16 %v285, %v277
        %v294 = vpack.c.bf16 %v286, %v278
        %v295 = vpack.c.bf16 %v287, %v279
        %v296 = vpack.c.bf16 %v288, %v280
        %v297 = vpack.c.bf16 %v289, %v281
        %v298 = vpack.c.bf16 %v290, %v282
        %v299 = vld [vmem:[#allocation5] sm:$0xf]
        %v300 = vld [vmem:[#allocation5 + $0x4] sm:$0xf]
        %v301 = vld [vmem:[#allocation5 + $0x8] sm:$0xf]
        %v302 = vld [vmem:[#allocation5 + $0xc] sm:$0xf]
        %v303 = vld [vmem:[#allocation5 + $0x10] sm:$0xf]
        %v304 = vld [vmem:[#allocation5 + $0x14] sm:$0xf]
        %v305 = vld [vmem:[#allocation5 + $0x18] sm:$0xf]
        %v306 = vld [vmem:[#allocation5 + $0x1c] sm:$0xf]
        %v307 = vld [vmem:[#allocation5 + $0x20] sm:$0xf]
        %v308 = vld [vmem:[#allocation5 + $0x24] sm:$0xf]
        %v309 = vld [vmem:[#allocation5 + $0x28] sm:$0xf]
        %v310 = vld [vmem:[#allocation5 + $0x2c] sm:$0xf]
        %v311 = vld [vmem:[#allocation5 + $0x30] sm:$0xf]
        %v312 = vld [vmem:[#allocation5 + $0x34] sm:$0xf]
        %v313 = vld [vmem:[#allocation5 + $0x38] sm:$0xf]
        %v314 = vld [vmem:[#allocation5 + $0x3c] sm:$0xf]
        %v315 = vld [vmem:[#allocation5 + $0x40] sm:$0xf]
        %v316 = vld [vmem:[#allocation5 + $0x44] sm:$0xf]
        %v317 = vld [vmem:[#allocation5 + $0x48] sm:$0xf]
        %v318 = vld [vmem:[#allocation5 + $0x4c] sm:$0xf]
        %v319 = vld [vmem:[#allocation5 + $0x50] sm:$0xf]
        %v320 = vld [vmem:[#allocation5 + $0x54] sm:$0xf]
        %v321 = vld [vmem:[#allocation5 + $0x58] sm:$0xf]
        %v322 = vld [vmem:[#allocation5 + $0x5c] sm:$0xf]
        %v323 = vld [vmem:[#allocation5 + $0x60] sm:$0xf]
        %v324 = vld [vmem:[#allocation5 + $0x64] sm:$0xf]
        %v325 = vld [vmem:[#allocation5 + $0x68] sm:$0xf]
        %v326 = vld [vmem:[#allocation5 + $0x6c] sm:$0xf]
        %v327 = vld [vmem:[#allocation5 + $0x70] sm:$0xf]
        %v328 = vld [vmem:[#allocation5 + $0x74] sm:$0xf]
        %v329 = vld [vmem:[#allocation5 + $0x78] sm:$0xf]
        %v330 = vld [vmem:[#allocation5 + $0x7c] sm:$0xf]
        %v331 = vld [vmem:[#allocation5 + $0x80] sm:$0xf]
        %v332 = vld [vmem:[#allocation5 + $0x84] sm:$0xf]
        %v333 = vld [vmem:[#allocation5 + $0x88] sm:$0xf]
        %v334 = vld [vmem:[#allocation5 + $0x8c] sm:$0xf]
        %v335 = vld [vmem:[#allocation5 + $0x90] sm:$0xf]
        %v336 = vld [vmem:[#allocation5 + $0x94] sm:$0xf]
        %v337 = vld [vmem:[#allocation5 + $0x98] sm:$0xf]
        %v338 = vld [vmem:[#allocation5 + $0x9c] sm:$0xf]
        %v339 = vld [vmem:[#allocation5 + $0xa0] sm:$0xf]
        %v340 = vld [vmem:[#allocation5 + $0xa4] sm:$0xf]
        %v341 = vld [vmem:[#allocation5 + $0xa8] sm:$0xf]
        %v342 = vld [vmem:[#allocation5 + $0xac] sm:$0xf]
        %v343 = vld [vmem:[#allocation5 + $0xb0] sm:$0xf]
        %v344 = vld [vmem:[#allocation5 + $0xb4] sm:$0xf]
        %v345 = vld [vmem:[#allocation5 + $0xb8] sm:$0xf]
        %v346 = vld [vmem:[#allocation5 + $0xbc] sm:$0xf]
        %v347 = vld [vmem:[#allocation5 + $0xc0] sm:$0xf]
        %v348 = vld [vmem:[#allocation5 + $0xc4] sm:$0xf]
        %v349 = vld [vmem:[#allocation5 + $0xc8] sm:$0xf]
        %v350 = vld [vmem:[#allocation5 + $0xcc] sm:$0xf]
        %v351 = vld [vmem:[#allocation5 + $0xd0] sm:$0xf]
        %v352 = vld [vmem:[#allocation5 + $0xd4] sm:$0xf]
        %v353 = vld [vmem:[#allocation5 + $0xd8] sm:$0xf]
        %v354 = vld [vmem:[#allocation5 + $0xdc] sm:$0xf]
        %v355 = vld [vmem:[#allocation5 + $0xe0] sm:$0xf]
        %v356 = vld [vmem:[#allocation5 + $0xe4] sm:$0xf]
        %v357 = vld [vmem:[#allocation5 + $0xe8] sm:$0xf]
        %v358 = vld [vmem:[#allocation5 + $0xec] sm:$0xf]
        %v359 = vld [vmem:[#allocation5 + $0xf0] sm:$0xf]
        %v360 = vld [vmem:[#allocation5 + $0xf4] sm:$0xf]
        %v361 = vld [vmem:[#allocation5 + $0xf8] sm:$0xf]
        %v362 = vld [vmem:[#allocation5 + $0xfc] sm:$0xf]
        %v363 = vld [vmem:[#allocation5 + $0x100] sm:$0xf]
        %v364 = vld [vmem:[#allocation5 + $0x104] sm:$0xf]
        %v365 = vld [vmem:[#allocation5 + $0x108] sm:$0xf]
        %v366 = vld [vmem:[#allocation5 + $0x10c] sm:$0xf]
        %v367 = vld [vmem:[#allocation5 + $0x110] sm:$0xf]
        %v368 = vld [vmem:[#allocation5 + $0x114] sm:$0xf]
        %v369 = vld [vmem:[#allocation5 + $0x118] sm:$0xf]
        %v370 = vld [vmem:[#allocation5 + $0x11c] sm:$0xf]
        %v371 = vld [vmem:[#allocation5 + $0x120] sm:$0xf]
        %v372 = vld [vmem:[#allocation5 + $0x124] sm:$0xf]
        %v373 = vld [vmem:[#allocation5 + $0x128] sm:$0xf]
        %v374 = vld [vmem:[#allocation5 + $0x12c] sm:$0xf]
        %v375 = vld [vmem:[#allocation5 + $0x130] sm:$0xf]
        %v376 = vld [vmem:[#allocation5 + $0x134] sm:$0xf]
        %v377 = vld [vmem:[#allocation5 + $0x138] sm:$0xf]
        %v378 = vld [vmem:[#allocation5 + $0x13c] sm:$0xf]
        %v379 = vld [vmem:[#allocation5 + $0x140] sm:$0xf]
        %v380 = vld [vmem:[#allocation5 + $0x144] sm:$0xf]
        %v381 = vld [vmem:[#allocation5 + $0x148] sm:$0xf]
        %v382 = vld [vmem:[#allocation5 + $0x14c] sm:$0xf]
        %v383 = vld [vmem:[#allocation5 + $0x150] sm:$0xf]
        %v384 = vld [vmem:[#allocation5 + $0x154] sm:$0xf]
        %v385 = vld [vmem:[#allocation5 + $0x158] sm:$0xf]
        %v386 = vld [vmem:[#allocation5 + $0x15c] sm:$0xf]
        %v387 = vld [vmem:[#allocation5 + $0x160] sm:$0xf]
        %v388 = vld [vmem:[#allocation5 + $0x164] sm:$0xf]
        %v389 = vld [vmem:[#allocation5 + $0x168] sm:$0xf]
        %v390 = vld [vmem:[#allocation5 + $0x16c] sm:$0xf]
        %v391 = vld [vmem:[#allocation5 + $0x170] sm:$0xf]
        %v392 = vld [vmem:[#allocation5 + $0x174] sm:$0xf]
        %v393 = vld [vmem:[#allocation5 + $0x178] sm:$0xf]
        %v394 = vld [vmem:[#allocation5 + $0x17c] sm:$0xf]
        %v395 = vld [vmem:[#allocation5 + $0x180] sm:$0xf]
        %v396 = vld [vmem:[#allocation5 + $0x184] sm:$0xf]
        %v397 = vld [vmem:[#allocation5 + $0x188] sm:$0xf]
        %v398 = vld [vmem:[#allocation5 + $0x18c] sm:$0xf]
        %v399 = vld [vmem:[#allocation5 + $0x190] sm:$0xf]
        %v400 = vld [vmem:[#allocation5 + $0x194] sm:$0xf]
        %v401 = vld [vmem:[#allocation5 + $0x198] sm:$0xf]
        %v402 = vld [vmem:[#allocation5 + $0x19c] sm:$0xf]
        %v403 = vld [vmem:[#allocation5 + $0x1a0] sm:$0xf]
        %v404 = vld [vmem:[#allocation5 + $0x1a4] sm:$0xf]
        %v405 = vld [vmem:[#allocation5 + $0x1a8] sm:$0xf]
        %v406 = vld [vmem:[#allocation5 + $0x1ac] sm:$0xf]
        %v407 = vld [vmem:[#allocation5 + $0x1b0] sm:$0xf]
        %v408 = vld [vmem:[#allocation5 + $0x1b4] sm:$0xf]
        %v409 = vld [vmem:[#allocation5 + $0x1b8] sm:$0xf]
        %v410 = vld [vmem:[#allocation5 + $0x1bc] sm:$0xf]
        %v411 = vld [vmem:[#allocation5 + $0x1c0] sm:$0xf]
        %v412 = vld [vmem:[#allocation5 + $0x1c4] sm:$0xf]
        %v413 = vld [vmem:[#allocation5 + $0x1c8] sm:$0xf]
        %v414 = vld [vmem:[#allocation5 + $0x1cc] sm:$0xf]
        %v415 = vld [vmem:[#allocation5 + $0x1d0] sm:$0xf]
        %v416 = vld [vmem:[#allocation5 + $0x1d4] sm:$0xf]
        %v417 = vld [vmem:[#allocation5 + $0x1d8] sm:$0xf]
        %v418 = vld [vmem:[#allocation5 + $0x1dc] sm:$0xf]
        %v419 = vld [vmem:[#allocation5 + $0x1e0] sm:$0xf]
        %v420 = vld [vmem:[#allocation5 + $0x1e4] sm:$0xf]
        %v421 = vld [vmem:[#allocation5 + $0x1e8] sm:$0xf]
        %v422 = vld [vmem:[#allocation5 + $0x1ec] sm:$0xf]
        %v423 = vld [vmem:[#allocation5 + $0x1f0] sm:$0xf]
        %v424 = vld [vmem:[#allocation5 + $0x1f4] sm:$0xf]
        %v425 = vld [vmem:[#allocation5 + $0x1f8] sm:$0xf]
        %v426 = vld [vmem:[#allocation5 + $0x1fc] sm:$0xf]
        %v427 = vld [vmem:[%s2] sm:$0x1]
        %v429 = vperm.slane %v427, 0
        %v559 = vunpack.c.l.b16 %v299
        %v560 = vunpack.c.l.b16 %v300
        %v561 = vunpack.c.l.b16 %v301
        %v562 = vunpack.c.l.b16 %v302
        %v563 = vunpack.c.l.b16 %v303
        %v564 = vunpack.c.l.b16 %v304
        %v565 = vunpack.c.l.b16 %v305
        %v566 = vunpack.c.l.b16 %v306
        %v567 = vunpack.c.l.b16 %v307
        %v568 = vunpack.c.l.b16 %v308
        %v569 = vunpack.c.l.b16 %v309
        %v570 = vunpack.c.l.b16 %v310
        %v571 = vunpack.c.l.b16 %v311
        %v572 = vunpack.c.l.b16 %v312
        %v573 = vunpack.c.l.b16 %v313
        %v574 = vunpack.c.l.b16 %v314
        %v575 = vunpack.c.l.b16 %v315
        %v576 = vunpack.c.l.b16 %v316
        %v577 = vunpack.c.l.b16 %v317
        %v578 = vunpack.c.l.b16 %v318
        %v579 = vunpack.c.l.b16 %v319
        %v580 = vunpack.c.l.b16 %v320
        %v581 = vunpack.c.l.b16 %v321
        %v582 = vunpack.c.l.b16 %v322
        %v583 = vunpack.c.l.b16 %v323
        %v584 = vunpack.c.l.b16 %v324
        %v585 = vunpack.c.l.b16 %v325
        %v586 = vunpack.c.l.b16 %v326
        %v587 = vunpack.c.l.b16 %v327
        %v588 = vunpack.c.l.b16 %v328
        %v589 = vunpack.c.l.b16 %v329
        %v590 = vunpack.c.l.b16 %v330
        %v591 = vunpack.c.l.b16 %v331
        %v592 = vunpack.c.l.b16 %v332
        %v593 = vunpack.c.l.b16 %v333
        %v594 = vunpack.c.l.b16 %v334
        %v595 = vunpack.c.l.b16 %v335
        %v596 = vunpack.c.l.b16 %v336
        %v597 = vunpack.c.l.b16 %v337
        %v598 = vunpack.c.l.b16 %v338
        %v599 = vunpack.c.l.b16 %v339
        %v600 = vunpack.c.l.b16 %v340
        %v601 = vunpack.c.l.b16 %v341
        %v602 = vunpack.c.l.b16 %v342
        %v603 = vunpack.c.l.b16 %v343
        %v604 = vunpack.c.l.b16 %v344
        %v605 = vunpack.c.l.b16 %v345
        %v606 = vunpack.c.l.b16 %v346
        %v607 = vunpack.c.l.b16 %v347
        %v608 = vunpack.c.l.b16 %v348
        %v609 = vunpack.c.l.b16 %v349
        %v610 = vunpack.c.l.b16 %v350
        %v611 = vunpack.c.l.b16 %v351
        %v612 = vunpack.c.l.b16 %v352
        %v613 = vunpack.c.l.b16 %v353
        %v614 = vunpack.c.l.b16 %v354
        %v615 = vunpack.c.l.b16 %v355
        %v616 = vunpack.c.l.b16 %v356
        %v617 = vunpack.c.l.b16 %v357
        %v618 = vunpack.c.l.b16 %v358
        %v619 = vunpack.c.l.b16 %v359
        %v620 = vunpack.c.l.b16 %v360
        %v621 = vunpack.c.l.b16 %v361
        %v622 = vunpack.c.l.b16 %v362
        %v623 = vunpack.c.l.b16 %v363
        %v624 = vunpack.c.l.b16 %v364
        %v625 = vunpack.c.l.b16 %v365
        %v626 = vunpack.c.l.b16 %v366
        %v627 = vunpack.c.l.b16 %v367
        %v628 = vunpack.c.l.b16 %v368
        %v629 = vunpack.c.l.b16 %v369
        %v630 = vunpack.c.l.b16 %v370
        %v631 = vunpack.c.l.b16 %v371
        %v632 = vunpack.c.l.b16 %v372
        %v633 = vunpack.c.l.b16 %v373
        %v634 = vunpack.c.l.b16 %v374
        %v635 = vunpack.c.l.b16 %v375
        %v636 = vunpack.c.l.b16 %v376
        %v637 = vunpack.c.l.b16 %v377
        %v638 = vunpack.c.l.b16 %v378
        %v639 = vunpack.c.l.b16 %v379
        %v640 = vunpack.c.l.b16 %v380
        %v641 = vunpack.c.l.b16 %v381
        %v642 = vunpack.c.l.b16 %v382
        %v643 = vunpack.c.l.b16 %v383
        %v644 = vunpack.c.l.b16 %v384
        %v645 = vunpack.c.l.b16 %v385
        %v646 = vunpack.c.l.b16 %v386
        %v647 = vunpack.c.l.b16 %v387
        %v648 = vunpack.c.l.b16 %v388
        %v649 = vunpack.c.l.b16 %v389
        %v650 = vunpack.c.l.b16 %v390
        %v651 = vunpack.c.l.b16 %v391
        %v652 = vunpack.c.l.b16 %v392
        %v653 = vunpack.c.l.b16 %v393
        %v654 = vunpack.c.l.b16 %v394
        %v655 = vunpack.c.l.b16 %v395
        %v656 = vunpack.c.l.b16 %v396
        %v657 = vunpack.c.l.b16 %v397
        %v658 = vunpack.c.l.b16 %v398
        %v659 = vunpack.c.l.b16 %v399
        %v660 = vunpack.c.l.b16 %v400
        %v661 = vunpack.c.l.b16 %v401
        %v662 = vunpack.c.l.b16 %v402
        %v663 = vunpack.c.l.b16 %v403
        %v664 = vunpack.c.l.b16 %v404
        %v665 = vunpack.c.l.b16 %v405
        %v666 = vunpack.c.l.b16 %v406
        %v667 = vunpack.c.l.b16 %v407
        %v668 = vunpack.c.l.b16 %v408
        %v669 = vunpack.c.l.b16 %v409
        %v670 = vunpack.c.l.b16 %v410
        %v671 = vunpack.c.l.b16 %v411
        %v672 = vunpack.c.l.b16 %v412
        %v673 = vunpack.c.l.b16 %v413
        %v674 = vunpack.c.l.b16 %v414
        %v675 = vunpack.c.l.b16 %v415
        %v676 = vunpack.c.l.b16 %v416
        %v677 = vunpack.c.l.b16 %v417
        %v678 = vunpack.c.l.b16 %v418
        %v679 = vunpack.c.l.b16 %v419
        %v680 = vunpack.c.l.b16 %v420
        %v681 = vunpack.c.l.b16 %v421
        %v682 = vunpack.c.l.b16 %v422
        %v683 = vunpack.c.l.b16 %v423
        %v684 = vunpack.c.l.b16 %v424
        %v685 = vunpack.c.l.b16 %v425
        %v686 = vunpack.c.l.b16 %v426
        %v687 = vpack.c.b16 %v560, %v559
        %v688 = vpack.c.b16 %v562, %v561
        %v689 = vpack.c.b16 %v564, %v563
        %v690 = vpack.c.b16 %v566, %v565
        %v691 = vpack.c.b16 %v568, %v567
        %v692 = vpack.c.b16 %v570, %v569
        %v693 = vpack.c.b16 %v572, %v571
        %v694 = vpack.c.b16 %v574, %v573
        %v695 = vpack.c.b16 %v576, %v575
        %v696 = vpack.c.b16 %v578, %v577
        %v697 = vpack.c.b16 %v580, %v579
        %v698 = vpack.c.b16 %v582, %v581
        %v699 = vpack.c.b16 %v584, %v583
        %v700 = vpack.c.b16 %v586, %v585
        %v701 = vpack.c.b16 %v588, %v587
        %v702 = vpack.c.b16 %v590, %v589
        %v703 = vpack.c.b16 %v592, %v591
        %v704 = vpack.c.b16 %v594, %v593
        %v705 = vpack.c.b16 %v596, %v595
        %v706 = vpack.c.b16 %v598, %v597
        %v707 = vpack.c.b16 %v600, %v599
        %v708 = vpack.c.b16 %v602, %v601
        %v709 = vpack.c.b16 %v604, %v603
        %v710 = vpack.c.b16 %v606, %v605
        %v711 = vpack.c.b16 %v608, %v607
        %v712 = vpack.c.b16 %v610, %v609
        %v713 = vpack.c.b16 %v612, %v611
        %v714 = vpack.c.b16 %v614, %v613
        %v715 = vpack.c.b16 %v616, %v615
        %v716 = vpack.c.b16 %v618, %v617
        %v717 = vpack.c.b16 %v620, %v619
        %v718 = vpack.c.b16 %v622, %v621
        %v719 = vpack.c.b16 %v624, %v623
        %v720 = vpack.c.b16 %v626, %v625
        %v721 = vpack.c.b16 %v628, %v627
        %v722 = vpack.c.b16 %v630, %v629
        %v723 = vpack.c.b16 %v632, %v631
        %v724 = vpack.c.b16 %v634, %v633
        %v725 = vpack.c.b16 %v636, %v635
        %v726 = vpack.c.b16 %v638, %v637
        %v727 = vpack.c.b16 %v640, %v639
        %v728 = vpack.c.b16 %v642, %v641
        %v729 = vpack.c.b16 %v644, %v643
        %v730 = vpack.c.b16 %v646, %v645
        %v731 = vpack.c.b16 %v648, %v647
        %v732 = vpack.c.b16 %v650, %v649
        %v733 = vpack.c.b16 %v652, %v651
        %v734 = vpack.c.b16 %v654, %v653
        %v735 = vpack.c.b16 %v656, %v655
        %v736 = vpack.c.b16 %v658, %v657
        %v737 = vpack.c.b16 %v660, %v659
        %v738 = vpack.c.b16 %v662, %v661
        %v739 = vpack.c.b16 %v664, %v663
        %v740 = vpack.c.b16 %v666, %v665
        %v741 = vpack.c.b16 %v668, %v667
        %v742 = vpack.c.b16 %v670, %v669
        %v743 = vpack.c.b16 %v672, %v671
        %v744 = vpack.c.b16 %v674, %v673
        %v745 = vpack.c.b16 %v676, %v675
        %v746 = vpack.c.b16 %v678, %v677
        %v747 = vpack.c.b16 %v680, %v679
        %v748 = vpack.c.b16 %v682, %v681
        %v749 = vpack.c.b16 %v684, %v683
        %v750 = vpack.c.b16 %v686, %v685
        %815 = vmatpush.bf16.msra.mxu0 %v694
        %816 = vmatpush.bf16.msra.mxu0 %v693
        %817 = vmatpush.bf16.msra.mxu0 %v692
        %818 = vmatpush.bf16.msra.mxu0 %v691
        %819 = vmatpush.bf16.msra.mxu0 %v690
        %820 = vmatpush.bf16.msra.mxu0 %v689
        %821 = vmatpush.bf16.msra.mxu0 %v688
        %822 = vmatpush.bf16.msra.mxu0 %v687
        %823 = vmatmul.bf16.gmra.mxu0 %v291
        %v824 = vpop.f32.mrf.mxu0
        %v825 = vadd.f32 %v429, %v824
        %v826 = vpop.f32.mrf.mxu0
        %v827 = vadd.f32 %v429, %v826
        %828 = vdwg.mxu0
        %829 = vmatpush.bf16.msra.mxu0 %v702
        %830 = vmatpush.bf16.msra.mxu0 %v701
        %831 = vmatpush.bf16.msra.mxu0 %v700
        %832 = vmatpush.bf16.msra.mxu0 %v699
        %833 = vmatpush.bf16.msra.mxu0 %v698
        %834 = vmatpush.bf16.msra.mxu0 %v697
        %835 = vmatpush.bf16.msra.mxu0 %v696
        %836 = vmatpush.bf16.msra.mxu0 %v695
        %837 = vmatmul.bf16.gmra.mxu0 %v292
        %v838 = vpop.f32.mrf.mxu0
        %v839 = vadd.f32 %v825, %v838
        %v840 = vpop.f32.mrf.mxu0
        %v841 = vadd.f32 %v827, %v840
        %842 = vdwg.mxu0
        %843 = vmatpush.bf16.msra.mxu0 %v710
        %844 = vmatpush.bf16.msra.mxu0 %v709
        %845 = vmatpush.bf16.msra.mxu0 %v708
        %846 = vmatpush.bf16.msra.mxu0 %v707
        %847 = vmatpush.bf16.msra.mxu0 %v706
        %848 = vmatpush.bf16.msra.mxu0 %v705
        %849 = vmatpush.bf16.msra.mxu0 %v704
        %850 = vmatpush.bf16.msra.mxu0 %v703
        %851 = vmatmul.bf16.gmra.mxu0 %v293
        %v852 = vpop.f32.mrf.mxu0
        %v853 = vadd.f32 %v839, %v852
        %v854 = vpop.f32.mrf.mxu0
        %v855 = vadd.f32 %v841, %v854
        %856 = vdwg.mxu0
        %857 = vmatpush.bf16.msra.mxu0 %v718
        %858 = vmatpush.bf16.msra.mxu0 %v717
        %859 = vmatpush.bf16.msra.mxu0 %v716
        %860 = vmatpush.bf16.msra.mxu0 %v715
        %861 = vmatpush.bf16.msra.mxu0 %v714
        %862 = vmatpush.bf16.msra.mxu0 %v713
        %863 = vmatpush.bf16.msra.mxu0 %v712
        %864 = vmatpush.bf16.msra.mxu0 %v711
        %865 = vmatmul.bf16.gmra.mxu0 %v294
        %v866 = vpop.f32.mrf.mxu0
        %v867 = vadd.f32 %v853, %v866
        %v868 = vpop.f32.mrf.mxu0
        %v869 = vadd.f32 %v855, %v868
        %870 = vdwg.mxu0
        %871 = vmatpush.bf16.msra.mxu0 %v726
        %872 = vmatpush.bf16.msra.mxu0 %v725
        %873 = vmatpush.bf16.msra.mxu0 %v724
        %874 = vmatpush.bf16.msra.mxu0 %v723
        %875 = vmatpush.bf16.msra.mxu0 %v722
        %876 = vmatpush.bf16.msra.mxu0 %v721
        %877 = vmatpush.bf16.msra.mxu0 %v720
        %878 = vmatpush.bf16.msra.mxu0 %v719
        %879 = vmatmul.bf16.gmra.mxu0 %v295
        %v880 = vpop.f32.mrf.mxu0
        %v881 = vadd.f32 %v867, %v880
        %v882 = vpop.f32.mrf.mxu0
        %v883 = vadd.f32 %v869, %v882
        %884 = vdwg.mxu0
        %885 = vmatpush.bf16.msra.mxu0 %v734
        %886 = vmatpush.bf16.msra.mxu0 %v733
        %887 = vmatpush.bf16.msra.mxu0 %v732
        %888 = vmatpush.bf16.msra.mxu0 %v731
        %889 = vmatpush.bf16.msra.mxu0 %v730
        %890 = vmatpush.bf16.msra.mxu0 %v729
        %891 = vmatpush.bf16.msra.mxu0 %v728
        %892 = vmatpush.bf16.msra.mxu0 %v727
        %893 = vmatmul.bf16.gmra.mxu0 %v296
        %v894 = vpop.f32.mrf.mxu0
        %v895 = vadd.f32 %v881, %v894
        %v896 = vpop.f32.mrf.mxu0
        %v897 = vadd.f32 %v883, %v896
        %898 = vdwg.mxu0
        %899 = vmatpush.bf16.msra.mxu0 %v742
        %900 = vmatpush.bf16.msra.mxu0 %v741
        %901 = vmatpush.bf16.msra.mxu0 %v740
        %902 = vmatpush.bf16.msra.mxu0 %v739
        %903 = vmatpush.bf16.msra.mxu0 %v738
        %904 = vmatpush.bf16.msra.mxu0 %v737
        %905 = vmatpush.bf16.msra.mxu0 %v736
        %906 = vmatpush.bf16.msra.mxu0 %v735
        %907 = vmatmul.bf16.gmra.mxu0 %v297
        %v908 = vpop.f32.mrf.mxu0
        %v909 = vadd.f32 %v895, %v908
        %v910 = vpop.f32.mrf.mxu0
        %v911 = vadd.f32 %v897, %v910
        %912 = vdwg.mxu0
        %913 = vmatpush.bf16.msra.mxu0 %v750
        %914 = vmatpush.bf16.msra.mxu0 %v749
        %915 = vmatpush.bf16.msra.mxu0 %v748
        %916 = vmatpush.bf16.msra.mxu0 %v747
        %917 = vmatpush.bf16.msra.mxu0 %v746
        %918 = vmatpush.bf16.msra.mxu0 %v745
        %919 = vmatpush.bf16.msra.mxu0 %v744
        %920 = vmatpush.bf16.msra.mxu0 %v743
        %921 = vmatmul.bf16.gmra.mxu0 %v298
        %v922 = vpop.f32.mrf.mxu0
        %v923 = vadd.f32 %v909, %v922
        %v924 = vpop.f32.mrf.mxu0
        %v925 = vadd.f32 %v911, %v924
        %926 = vdwg.mxu0
        %vm927 = vcmp.ge.f32.partialorder %v923, 1.0
        %vm928 = vcmp.ge.f32.partialorder %v925, 1.0
        %v929 = vsel %vm927, 1, 0
        %v930 = vsel %vm928, 1, 0
        %v931 = vcvt.s32.f32 %v929
        %v932 = vcvt.s32.f32 %v930
        %v933 = vpack.c.bf16 %v931, %v931
        %v934 = vpack.c.bf16 %v932, %v932
        %935 = vst [vmem:[%s208] sm:$0xf] %v933
        %936 = vst [vmem:[%s208 + $0x4] sm:$0xf] %v934
        %s937 = sand.u32 %s97, 1
        %s938 = scalar_lea.sflag [#allocation4], %s937
        %s939 = sand.u32 %s97, 1
        %s940 = smul.addr %s939, 8
        %s941 = scalar_lea.vmem [#allocation7], %s940
        // Predicated region
        $region41: #{tpu_custom_call.1} parent=31 // pred_check
          %p942 = pneg %p107
        $region42: #{tpu_custom_call.1} parent=31 // pred_check_branch
          %944 = sbr.rel (%p942) target = $region44
        $region43: #{tpu_custom_call.1} parent=31 // pred_region
          %s945 = smul.u32 2, %s21
          %947 = vsyncadd %s938, 0
          %s948 = smul.addr %s945, 4
          %s949 = scalar_lea.hbm %s3, %s948
          %s950 = sshll.u32 %s941, 4
          %s951 = int_to_ptr.vmem [resolvable:$true] %s950
          %s952 = sshll.u32 %s949, 4
          %s953 = int_to_ptr.hbm [resolvable:$true] %s952
          %958 = dma.vmem_to_hbm [thread:$0]  %s951, 128, %s953, %s938, 64, 64, 4
        $region44: #{tpu_custom_call.1} parent=31 // pred_fallthru
          _
      $region32: #{tpu_custom_call.1} parent=5 // pred_fallthru
        _
      %p959 = scmp.le.s32.totalorder 2, %s16
      // Predicated region
      $region45: #{tpu_custom_call.1} parent=5 // pred_check
        %p960 = pneg %p959
      $region46: #{tpu_custom_call.1} parent=5 // pred_check_branch
        %962 = sbr.rel (%p960) target = $region48
      $region47: #{tpu_custom_call.1} parent=5 // pred_region
        %s963 = ssub.s32 %s16, 2
        // Predicated region
        $region49: #{tpu_custom_call.1} parent=47 // pred_check
          %p964 = pneg %p113
        $region50: #{tpu_custom_call.1} parent=47 // pred_check_branch
          %966 = sbr.rel (%p964) target = $region52
        $region51: #{tpu_custom_call.1} parent=47 // pred_region
          %s967 = sand.u32 %s98, 1
          %s968 = scalar_lea.sflag [#allocation4], %s967
          %s969 = sand.u32 %s98, 1
          %s970 = smul.addr %s969, 8
          %s971 = scalar_lea.vmem [#allocation7], %s970
          %973 = dma.done %s968, 128
        $region52: #{tpu_custom_call.1} parent=47 // pred_fallthru
          _
      $region48: #{tpu_custom_call.1} parent=5 // pred_fallthru
        _
    $region6: #{tpu_custom_call.1} parent=1 // loop_footer
      %s20 = sadd.s32 1, %s16
    $region7: #{tpu_custom_call.1} parent=1 // loop_footer_branch
      %15 = sbr.rel target = $region3
    $region8: #{tpu_custom_call.1} parent=1 // loop_exit
      _
    %974 = vsyncpa [#allocation3], 1
    %s975 = scalar_lea.sflag [#allocation3], 1
    %976 = vsyncpa %s975, 1
    %977 = vsyncpa [#allocation6], 1
    %978 = vsyncpa [#allocation4], 1
    %s979 = scalar_lea.sflag [#allocation4], 1
    %980 = vsyncpa %s979, 1

</llo_original>
